<compile_context>
chip_gen: v5e
topology: v5e:2x2
jax: 0.10.0
libtpu: 0.0.40
codegen_flags: <defaults>
</compile_context>

<pallas_src>
import functools

import jax
import jax.numpy as jnp
from jax.experimental import pallas as pl
from jax.experimental.pallas import tpu as pltpu


# --------------------------------------------------------------------------
# Fused kernel: n_layers x LSTM over T steps  +  FC + sigmoid (last step only)
# --------------------------------------------------------------------------
def _make_fused_lstm_fc_kernel(n_layers, T, B, H, n_bufs):
    """Builds the fused kernel body (all dims static, closed over).

    Ref order:
      inputs : x_flat (T*B, E), h0 (L,B,H), c0 (L,B,H),
               [w_ih_l (in_l,4H), w_hh_l (H,4H), b_l (1,4H)] * L,
               fc_w (H,C), fc_b (1,C)
      outputs: sig (B,C), h_n (L,B,H), c_n (L,B,H)
      scratch: n_bufs x (T*B,H) VMEM sequence buffers
    """
    n_in = 5 + 3 * n_layers

    def kernel(*refs):
        x_ref, h0_ref, c0_ref = refs[0], refs[1], refs[2]
        w_refs = refs[3:3 + 3 * n_layers]
        fcw_ref = refs[3 + 3 * n_layers]
        fcb_ref = refs[4 + 3 * n_layers]
        sig_ref = refs[n_in + 0]
        hn_ref = refs[n_in + 1]
        cn_ref = refs[n_in + 2]
        seq_bufs = refs[n_in + 3:]

        h_last = None

        for layer in range(n_layers):
            w_ih = w_refs[3 * layer + 0][...]      # (in, 4H)
            w_hh = w_refs[3 * layer + 1][...]      # (H, 4H)
            bias = w_refs[3 * layer + 2][...]      # (1, 4H)

            # ---- hoisted input projection: one big matmul for all timesteps ----
            if layer == 0:
                x_all = x_ref[...]                              # (T*B, E)
            else:
                x_all = seq_bufs[(layer - 1) % n_bufs][...]     # (T*B, H)
            xproj = jnp.dot(x_all, w_ih,
                            preferred_element_type=jnp.float32) + bias  # (T*B, 4H)

            is_last_layer = layer == n_layers - 1
            out_buf = None if is_last_layer else seq_bufs[layer % n_bufs]

            h = h0_ref[layer]                                   # (B, H)
            c = c0_ref[layer]                                   # (B, H)

            # ---- fully unrolled in-kernel time loop (T static & small):
            #      only h @ W_hh is left on the serial critical path.
            for t in range(T):
                gates = xproj[t * B:(t + 1) * B, :] + jnp.dot(
                    h, w_hh, preferred_element_type=jnp.float32)        # (B, 4H)
                # One full-width sigmoid covers the i/f/o gates; tanh only on g.
                sig_all = jax.nn.sigmoid(gates)
                i_g = sig_all[:, 0 * H:1 * H]
                f_g = sig_all[:, 1 * H:2 * H]
                o_g = sig_all[:, 3 * H:4 * H]
                g_g = jnp.tanh(gates[:, 2 * H:3 * H])
                c = f_g * c + i_g * g_g
                h = o_g * jnp.tanh(c)
                if not is_last_layer:
                    # Intermediate activations stay in VMEM only (never hit HBM).
                    out_buf[pl.ds(t * B, B), :] = h

            hn_ref[layer] = h
            cn_ref[layer] = c
            h_last = h

        # ---- FC + sigmoid on the last timestep of the last layer only ----
        logits = jnp.dot(h_last, fcw_ref[...],
                         preferred_element_type=jnp.float32) + fcb_ref[...]
        sig_ref[...] = jax.nn.sigmoid(logits)

    return kernel


def fused_lstm_fc(x_flat, h0, c0, layer_weights, fc_w, fc_b):
    """x_flat: (T*B, E) time-major flattened embeddings. Returns (sig, h_n, c_n)."""
    L, B, H = h0.shape
    TB = x_flat.shape[0]
    T = TB // B
    C = fc_w.shape[-1]

    flat_w = []
    for w_ih, w_hh, b in layer_weights:
        flat_w.extend((w_ih, w_hh, b))

    # Number of intermediate-sequence scratch buffers actually needed.
    n_bufs = 0 if L == 1 else (1 if L == 2 else 2)

    kernel = _make_fused_lstm_fc_kernel(L, T, B, H, max(n_bufs, 1))
    return pl.pallas_call(
        kernel,
        out_shape=(
            jax.ShapeDtypeStruct((B, C), jnp.float32),
            jax.ShapeDtypeStruct((L, B, H), jnp.float32),
            jax.ShapeDtypeStruct((L, B, H), jnp.float32),
        ),
        scratch_shapes=[pltpu.VMEM((T * B, H), jnp.float32)
                        for _ in range(n_bufs)],
    )(x_flat, h0, c0, *flat_w, fc_w, fc_b)


# --------------------------------------------------------------------------
# Model glue (embedding gather + output slicing) and parameter init
# --------------------------------------------------------------------------
def init_params(key, feat_size, embed_size, hidden_size, n_layers, num_classes):
    keys = jax.random.split(key, 3 + 4 * n_layers)
    params = {}
    params["embedding"] = jax.random.normal(
        keys[0], (feat_size, embed_size), jnp.float32)
    k = 1.0 / jnp.sqrt(hidden_size)
    ki = 1
    for l in range(n_layers):
        in_dim = embed_size if l == 0 else hidden_size
        params[f"w_ih_{l}"] = jax.random.uniform(
            keys[ki], (in_dim, 4 * hidden_size), jnp.float32, -k, k); ki += 1
        params[f"w_hh_{l}"] = jax.random.uniform(
            keys[ki], (hidden_size, 4 * hidden_size), jnp.float32, -k, k); ki += 1
        b_ih = jax.random.uniform(
            keys[ki], (4 * hidden_size,), jnp.float32, -k, k); ki += 1
        b_hh = jax.random.uniform(
            keys[ki], (4 * hidden_size,), jnp.float32, -k, k); ki += 1
        params[f"b_{l}"] = (b_ih + b_hh).reshape(1, 4 * hidden_size)
    kf = 1.0 / jnp.sqrt(hidden_size)
    params["fc_w"] = jax.random.uniform(
        keys[-2], (hidden_size, num_classes), jnp.float32, -kf, kf)
    params["fc_b"] = jax.random.uniform(
        keys[-1], (1, num_classes), jnp.float32, -kf, kf)
    return params


def init_hidden(batch, n_layers, hidden_size):
    h = jnp.zeros((n_layers, batch, hidden_size), jnp.float32)
    c = jnp.zeros((n_layers, batch, hidden_size), jnp.float32)
    return (h, c)


@functools.partial(jax.jit, static_argnames=("n_layers",))
def lstm_model_forward(params, x_ids, hidden, *, n_layers):
    """Mirrors LSTMModel.forward (eval mode). Returns (sigmoid_last, (h_n, c_n))."""
    B, T = x_ids.shape
    h0_all, c0_all = hidden

    # Embedding gather (plain-JAX glue), time-major and flattened to (T*B, E) so
    # the kernel never has to reshape across tiled dims.
    emb_tb = params["embedding"][jnp.swapaxes(x_ids, 0, 1)]       # (T, B, E)
    x_flat = emb_tb.reshape(T * B, -1)

    layer_weights = [
        (params[f"w_ih_{l}"], params[f"w_hh_{l}"], params[f"b_{l}"])
        for l in range(n_layers)
    ]

    # nn.Dropout(0.5) in eval mode is identity.
    # TODO(synk): training-mode dropout (random mask + 2x scale) not implemented.
    sig, h_n, c_n = fused_lstm_fc(
        x_flat, h0_all, c0_all, layer_weights, params["fc_w"], params["fc_b"])

    # PyTorch: sigmoid_out.view(B, -1)[:, -1] == last class logit of the last
    # timestep, which depends only on the last layer's final hidden state.
    sigmoid_last = sig[:, -1]
    return sigmoid_last, (h_n, c_n)


# --------------------------------------------------------------------------
# Pure-JAX reference (for a loose-tolerance sanity check)
# --------------------------------------------------------------------------
def lstm_model_reference(params, x_ids, hidden, n_layers):
    h0_all, c0_all = hidden
    emb = params["embedding"][x_ids]            # (B, T, E)
    B, T, _ = emb.shape
    H = h0_all.shape[-1]
    seq = emb
    h_fin, c_fin = [], []
    for l in range(n_layers):
        w_ih, w_hh, b = params[f"w_ih_{l}"], params[f"w_hh_{l}"], params[f"b_{l}"]
        h, c = h0_all[l], c0_all[l]
        outs = []
        for t in range(T):
            g = seq[:, t, :] @ w_ih + h @ w_hh + b
            i = jax.nn.sigmoid(g[:, :H])
            f = jax.nn.sigmoid(g[:, H:2 * H])
            gg = jnp.tanh(g[:, 2 * H:3 * H])
            o = jax.nn.sigmoid(g[:, 3 * H:])
            c = f * c + i * gg
            h = o * jnp.tanh(c)
            outs.append(h)
        seq = jnp.stack(outs, axis=1)
        h_fin.append(h)
        c_fin.append(c)
    logits = seq[:, -1, :] @ params["fc_w"] + params["fc_b"]
    sig_last = jax.nn.sigmoid(logits)[:, -1]
    return sig_last, (jnp.stack(h_fin), jnp.stack(c_fin))


if __name__ == "__main__":
    # Small shapes consistent with the module.
    feat_size, embed_size, hidden_size = 50, 32, 32
    n_layers, num_classes = 2, 4
    B, T = 2, 8

    key = jax.random.PRNGKey(0)
    pkey, xkey = jax.random.split(key)
    params = init_params(pkey, feat_size, embed_size, hidden_size,
                         n_layers, num_classes)
    x_ids = jax.random.randint(xkey, (B, T), 0, feat_size, dtype=jnp.int32)
    hidden = init_hidden(B, n_layers, hidden_size)

    sigmoid_last, (h_n, c_n) = lstm_model_forward(
        params, x_ids, hidden, n_layers=n_layers)
    jax.block_until_ready((sigmoid_last, h_n, c_n))

    assert sigmoid_last.shape == (B,)
    assert h_n.shape == (n_layers, B, hidden_size)
    assert c_n.shape == (n_layers, B, hidden_size)

    # Loose-tolerance sanity check vs. pure-JAX reference (different accumulation
    # order / MXU f32 precision => not bit-exact).
    ref_sig, (ref_h, ref_c) = lstm_model_reference(params, x_ids, hidden, n_layers)
    assert jnp.allclose(sigmoid_last, ref_sig, rtol=5e-2, atol=5e-2)
    assert jnp.allclose(h_n, ref_h, rtol=5e-2, atol=5e-2)
    assert jnp.allclose(c_n, ref_c, rtol=5e-2, atol=5e-2)

    print("KERNEL_OK")
</pallas_src>

<mosaic_0001>
module attributes {stable_mosaic.version = 11 : i64} {
  func.func @kernel(%arg0: memref<16x32xf32, #tpu.memory_space<vmem>>, %arg1: memref<2x2x32xf32, #tpu.memory_space<vmem>>, %arg2: memref<2x2x32xf32, #tpu.memory_space<vmem>>, %arg3: memref<32x128xf32, #tpu.memory_space<vmem>>, %arg4: memref<32x128xf32, #tpu.memory_space<vmem>>, %arg5: memref<1x128xf32, #tpu.memory_space<vmem>>, %arg6: memref<32x128xf32, #tpu.memory_space<vmem>>, %arg7: memref<32x128xf32, #tpu.memory_space<vmem>>, %arg8: memref<1x128xf32, #tpu.memory_space<vmem>>, %arg9: memref<32x4xf32, #tpu.memory_space<vmem>>, %arg10: memref<1x4xf32, #tpu.memory_space<vmem>>, %arg11: memref<2x4xf32, #tpu.memory_space<vmem>>, %arg12: memref<2x2x32xf32, #tpu.memory_space<vmem>>, %arg13: memref<2x2x32xf32, #tpu.memory_space<vmem>>, %arg14: memref<16x32xf32, #tpu.memory_space<vmem>>) attributes {dimension_semantics = [], scalar_prefetch = 0 : i64, scratch_operands = 1 : i64, tpu.core_type = #tpu.core_type<tc>} {
    %c0 = arith.constant 0 : index
    %c0_0 = arith.constant 0 : index
    %0 = vector.load %arg3[%c0, %c0_0] : memref<32x128xf32, #tpu.memory_space<vmem>>, vector<32x128xf32>
    %c0_1 = arith.constant 0 : index
    %c0_2 = arith.constant 0 : index
    %1 = vector.load %arg4[%c0_1, %c0_2] : memref<32x128xf32, #tpu.memory_space<vmem>>, vector<32x128xf32>
    %c0_3 = arith.constant 0 : index
    %c0_4 = arith.constant 0 : index
    %2 = vector.load %arg5[%c0_3, %c0_4] : memref<1x128xf32, #tpu.memory_space<vmem>>, vector<1x128xf32>
    %c0_5 = arith.constant 0 : index
    %c0_6 = arith.constant 0 : index
    %3 = vector.load %arg0[%c0_5, %c0_6] : memref<16x32xf32, #tpu.memory_space<vmem>>, vector<16x32xf32>
    %cst = arith.constant dense<0.000000e+00> : vector<16x128xf32>
    %4 = tpu.matmul %3, %0, %cst {dimension_numbers = #tpu.dot_dimension_numbers<[1], [0], [0], [1], [0, 0, 1, 1], [], []>} : vector<16x32xf32>, vector<32x128xf32>, vector<16x128xf32> -> vector<16x128xf32>
    %5 = vector.broadcast %2 : vector<1x128xf32> to vector<16x128xf32>
    %6 = arith.addf %4, %5 : vector<16x128xf32>
    %c0_7 = arith.constant 0 : index
    %c0_8 = arith.constant 0 : index
    %c0_9 = arith.constant 0 : index
    %7 = vector.load %arg1[%c0_7, %c0_8, %c0_9] : memref<2x2x32xf32, #tpu.memory_space<vmem>>, vector<1x2x32xf32>
    %8 = vector.shape_cast %7 : vector<1x2x32xf32> to vector<2x32xf32>
    %c0_10 = arith.constant 0 : index
    %c0_11 = arith.constant 0 : index
    %c0_12 = arith.constant 0 : index
    %9 = vector.load %arg2[%c0_10, %c0_11, %c0_12] : memref<2x2x32xf32, #tpu.memory_space<vmem>>, vector<1x2x32xf32>
    %10 = vector.shape_cast %9 : vector<1x2x32xf32> to vector<2x32xf32>
    %11 = vector.extract_strided_slice %6 {offsets = [0, 0], sizes = [2, 128], strides = [1, 1]} : vector<16x128xf32> to vector<2x128xf32>
    %cst_13 = arith.constant dense<0.000000e+00> : vector<2x128xf32>
    %12 = tpu.matmul %8, %1, %cst_13 {dimension_numbers = #tpu.dot_dimension_numbers<[1], [0], [0], [1], [0, 0, 1, 1], [], []>} : vector<2x32xf32>, vector<32x128xf32>, vector<2x128xf32> -> vector<2x128xf32>
    %13 = arith.addf %11, %12 : vector<2x128xf32>
    %14 = arith.negf %13 : vector<2x128xf32>
    %15 = math.exp %14 : vector<2x128xf32>
    %cst_14 = arith.constant 1.000000e+00 : f32
    %16 = vector.broadcast %cst_14 : f32 to vector<2x128xf32>
    %17 = arith.addf %16, %15 : vector<2x128xf32>
    %18 = arith.divf %16, %17 : vector<2x128xf32>
    %19 = vector.extract_strided_slice %18 {offsets = [0, 0], sizes = [2, 32], strides = [1, 1]} : vector<2x128xf32> to vector<2x32xf32>
    %20 = vector.extract_strided_slice %18 {offsets = [0, 32], sizes = [2, 32], strides = [1, 1]} : vector<2x128xf32> to vector<2x32xf32>
    %21 = vector.extract_strided_slice %18 {offsets = [0, 96], sizes = [2, 32], strides = [1, 1]} : vector<2x128xf32> to vector<2x32xf32>
    %22 = vector.extract_strided_slice %13 {offsets = [0, 64], sizes = [2, 32], strides = [1, 1]} : vector<2x128xf32> to vector<2x32xf32>
    %23 = math.tanh %22 : vector<2x32xf32>
    %24 = arith.mulf %20, %10 : vector<2x32xf32>
    %25 = arith.mulf %19, %23 : vector<2x32xf32>
    %26 = arith.addf %24, %25 : vector<2x32xf32>
    %27 = math.tanh %26 : vector<2x32xf32>
    %28 = arith.mulf %21, %27 : vector<2x32xf32>
    %c0_15 = arith.constant 0 : index
    %c0_16 = arith.constant 0 : index
    %29 = vector.load %arg14[%c0_15, %c0_16] : memref<16x32xf32, #tpu.memory_space<vmem>>, vector<2x32xf32>
    tpu.vector_store %arg14[%c0_15, %c0_16], %28 {strides = array<i32>} : memref<16x32xf32, #tpu.memory_space<vmem>>, vector<2x32xf32>,
    %30 = vector.extract_strided_slice %6 {offsets = [2, 0], sizes = [2, 128], strides = [1, 1]} : vector<16x128xf32> to vector<2x128xf32>
    %cst_17 = arith.constant dense<0.000000e+00> : vector<2x128xf32>
    %31 = tpu.matmul %28, %1, %cst_17 {dimension_numbers = #tpu.dot_dimension_numbers<[1], [0], [0], [1], [0, 0, 1, 1], [], []>} : vector<2x32xf32>, vector<32x128xf32>, vector<2x128xf32> -> vector<2x128xf32>
    %32 = arith.addf %30, %31 : vector<2x128xf32>
    %33 = arith.negf %32 : vector<2x128xf32>
    %34 = math.exp %33 : vector<2x128xf32>
    %cst_18 = arith.constant 1.000000e+00 : f32
    %35 = vector.broadcast %cst_18 : f32 to vector<2x128xf32>
    %36 = arith.addf %35, %34 : vector<2x128xf32>
    %37 = arith.divf %35, %36 : vector<2x128xf32>
    %38 = vector.extract_strided_slice %37 {offsets = [0, 0], sizes = [2, 32], strides = [1, 1]} : vector<2x128xf32> to vector<2x32xf32>
    %39 = vector.extract_strided_slice %37 {offsets = [0, 32], sizes = [2, 32], strides = [1, 1]} : vector<2x128xf32> to vector<2x32xf32>
    %40 = vector.extract_strided_slice %37 {offsets = [0, 96], sizes = [2, 32], strides = [1, 1]} : vector<2x128xf32> to vector<2x32xf32>
    %41 = vector.extract_strided_slice %32 {offsets = [0, 64], sizes = [2, 32], strides = [1, 1]} : vector<2x128xf32> to vector<2x32xf32>
    %42 = math.tanh %41 : vector<2x32xf32>
    %43 = arith.mulf %39, %26 : vector<2x32xf32>
    %44 = arith.mulf %38, %42 : vector<2x32xf32>
    %45 = arith.addf %43, %44 : vector<2x32xf32>
    %46 = math.tanh %45 : vector<2x32xf32>
    %47 = arith.mulf %40, %46 : vector<2x32xf32>
    %c2 = arith.constant 2 : index
    %c0_19 = arith.constant 0 : index
    %48 = vector.load %arg14[%c2, %c0_19] : memref<16x32xf32, #tpu.memory_space<vmem>>, vector<2x32xf32>
    tpu.vector_store %arg14[%c2, %c0_19], %47 {strides = array<i32>} : memref<16x32xf32, #tpu.memory_space<vmem>>, vector<2x32xf32>,
    %49 = vector.extract_strided_slice %6 {offsets = [4, 0], sizes = [2, 128], strides = [1, 1]} : vector<16x128xf32> to vector<2x128xf32>
    %cst_20 = arith.constant dense<0.000000e+00> : vector<2x128xf32>
    %50 = tpu.matmul %47, %1, %cst_20 {dimension_numbers = #tpu.dot_dimension_numbers<[1], [0], [0], [1], [0, 0, 1, 1], [], []>} : vector<2x32xf32>, vector<32x128xf32>, vector<2x128xf32> -> vector<2x128xf32>
    %51 = arith.addf %49, %50 : vector<2x128xf32>
    %52 = arith.negf %51 : vector<2x128xf32>
    %53 = math.exp %52 : vector<2x128xf32>
    %cst_21 = arith.constant 1.000000e+00 : f32
    %54 = vector.broadcast %cst_21 : f32 to vector<2x128xf32>
    %55 = arith.addf %54, %53 : vector<2x128xf32>
    %56 = arith.divf %54, %55 : vector<2x128xf32>
    %57 = vector.extract_strided_slice %56 {offsets = [0, 0], sizes = [2, 32], strides = [1, 1]} : vector<2x128xf32> to vector<2x32xf32>
    %58 = vector.extract_strided_slice %56 {offsets = [0, 32], sizes = [2, 32], strides = [1, 1]} : vector<2x128xf32> to vector<2x32xf32>
    %59 = vector.extract_strided_slice %56 {offsets = [0, 96], sizes = [2, 32], strides = [1, 1]} : vector<2x128xf32> to vector<2x32xf32>
    %60 = vector.extract_strided_slice %51 {offsets = [0, 64], sizes = [2, 32], strides = [1, 1]} : vector<2x128xf32> to vector<2x32xf32>
    %61 = math.tanh %60 : vector<2x32xf32>
    %62 = arith.mulf %58, %45 : vector<2x32xf32>
    %63 = arith.mulf %57, %61 : vector<2x32xf32>
    %64 = arith.addf %62, %63 : vector<2x32xf32>
    %65 = math.tanh %64 : vector<2x32xf32>
    %66 = arith.mulf %59, %65 : vector<2x32xf32>
    %c4 = arith.constant 4 : index
    %c0_22 = arith.constant 0 : index
    %67 = vector.load %arg14[%c4, %c0_22] : memref<16x32xf32, #tpu.memory_space<vmem>>, vector<2x32xf32>
    tpu.vector_store %arg14[%c4, %c0_22], %66 {strides = array<i32>} : memref<16x32xf32, #tpu.memory_space<vmem>>, vector<2x32xf32>,
    %68 = vector.extract_strided_slice %6 {offsets = [6, 0], sizes = [2, 128], strides = [1, 1]} : vector<16x128xf32> to vector<2x128xf32>
    %cst_23 = arith.constant dense<0.000000e+00> : vector<2x128xf32>
    %69 = tpu.matmul %66, %1, %cst_23 {dimension_numbers = #tpu.dot_dimension_numbers<[1], [0], [0], [1], [0, 0, 1, 1], [], []>} : vector<2x32xf32>, vector<32x128xf32>, vector<2x128xf32> -> vector<2x128xf32>
    %70 = arith.addf %68, %69 : vector<2x128xf32>
    %71 = arith.negf %70 : vector<2x128xf32>
    %72 = math.exp %71 : vector<2x128xf32>
    %cst_24 = arith.constant 1.000000e+00 : f32
    %73 = vector.broadcast %cst_24 : f32 to vector<2x128xf32>
    %74 = arith.addf %73, %72 : vector<2x128xf32>
    %75 = arith.divf %73, %74 : vector<2x128xf32>
    %76 = vector.extract_strided_slice %75 {offsets = [0, 0], sizes = [2, 32], strides = [1, 1]} : vector<2x128xf32> to vector<2x32xf32>
    %77 = vector.extract_strided_slice %75 {offsets = [0, 32], sizes = [2, 32], strides = [1, 1]} : vector<2x128xf32> to vector<2x32xf32>
    %78 = vector.extract_strided_slice %75 {offsets = [0, 96], sizes = [2, 32], strides = [1, 1]} : vector<2x128xf32> to vector<2x32xf32>
    %79 = vector.extract_strided_slice %70 {offsets = [0, 64], sizes = [2, 32], strides = [1, 1]} : vector<2x128xf32> to vector<2x32xf32>
    %80 = math.tanh %79 : vector<2x32xf32>
    %81 = arith.mulf %77, %64 : vector<2x32xf32>
    %82 = arith.mulf %76, %80 : vector<2x32xf32>
    %83 = arith.addf %81, %82 : vector<2x32xf32>
    %84 = math.tanh %83 : vector<2x32xf32>
    %85 = arith.mulf %78, %84 : vector<2x32xf32>
    %c6 = arith.constant 6 : index
    %c0_25 = arith.constant 0 : index
    %86 = vector.load %arg14[%c6, %c0_25] : memref<16x32xf32, #tpu.memory_space<vmem>>, vector<2x32xf32>
    tpu.vector_store %arg14[%c6, %c0_25], %85 {strides = array<i32>} : memref<16x32xf32, #tpu.memory_space<vmem>>, vector<2x32xf32>,
    %87 = vector.extract_strided_slice %6 {offsets = [8, 0], sizes = [2, 128], strides = [1, 1]} : vector<16x128xf32> to vector<2x128xf32>
    %cst_26 = arith.constant dense<0.000000e+00> : vector<2x128xf32>
    %88 = tpu.matmul %85, %1, %cst_26 {dimension_numbers = #tpu.dot_dimension_numbers<[1], [0], [0], [1], [0, 0, 1, 1], [], []>} : vector<2x32xf32>, vector<32x128xf32>, vector<2x128xf32> -> vector<2x128xf32>
    %89 = arith.addf %87, %88 : vector<2x128xf32>
    %90 = arith.negf %89 : vector<2x128xf32>
    %91 = math.exp %90 : vector<2x128xf32>
    %cst_27 = arith.constant 1.000000e+00 : f32
    %92 = vector.broadcast %cst_27 : f32 to vector<2x128xf32>
    %93 = arith.addf %92, %91 : vector<2x128xf32>
    %94 = arith.divf %92, %93 : vector<2x128xf32>
    %95 = vector.extract_strided_slice %94 {offsets = [0, 0], sizes = [2, 32], strides = [1, 1]} : vector<2x128xf32> to vector<2x32xf32>
    %96 = vector.extract_strided_slice %94 {offsets = [0, 32], sizes = [2, 32], strides = [1, 1]} : vector<2x128xf32> to vector<2x32xf32>
    %97 = vector.extract_strided_slice %94 {offsets = [0, 96], sizes = [2, 32], strides = [1, 1]} : vector<2x128xf32> to vector<2x32xf32>
    %98 = vector.extract_strided_slice %89 {offsets = [0, 64], sizes = [2, 32], strides = [1, 1]} : vector<2x128xf32> to vector<2x32xf32>
    %99 = math.tanh %98 : vector<2x32xf32>
    %100 = arith.mulf %96, %83 : vector<2x32xf32>
    %101 = arith.mulf %95, %99 : vector<2x32xf32>
    %102 = arith.addf %100, %101 : vector<2x32xf32>
    %103 = math.tanh %102 : vector<2x32xf32>
    %104 = arith.mulf %97, %103 : vector<2x32xf32>
    %c8 = arith.constant 8 : index
    %c0_28 = arith.constant 0 : index
    %105 = vector.load %arg14[%c8, %c0_28] : memref<16x32xf32, #tpu.memory_space<vmem>>, vector<2x32xf32>
    tpu.vector_store %arg14[%c8, %c0_28], %104 {strides = array<i32>} : memref<16x32xf32, #tpu.memory_space<vmem>>, vector<2x32xf32>,
    %106 = vector.extract_strided_slice %6 {offsets = [10, 0], sizes = [2, 128], strides = [1, 1]} : vector<16x128xf32> to vector<2x128xf32>
    %cst_29 = arith.constant dense<0.000000e+00> : vector<2x128xf32>
    %107 = tpu.matmul %104, %1, %cst_29 {dimension_numbers = #tpu.dot_dimension_numbers<[1], [0], [0], [1], [0, 0, 1, 1], [], []>} : vector<2x32xf32>, vector<32x128xf32>, vector<2x128xf32> -> vector<2x128xf32>
    %108 = arith.addf %106, %107 : vector<2x128xf32>
    %109 = arith.negf %108 : vector<2x128xf32>
    %110 = math.exp %109 : vector<2x128xf32>
    %cst_30 = arith.constant 1.000000e+00 : f32
    %111 = vector.broadcast %cst_30 : f32 to vector<2x128xf32>
    %112 = arith.addf %111, %110 : vector<2x128xf32>
    %113 = arith.divf %111, %112 : vector<2x128xf32>
    %114 = vector.extract_strided_slice %113 {offsets = [0, 0], sizes = [2, 32], strides = [1, 1]} : vector<2x128xf32> to vector<2x32xf32>
    %115 = vector.extract_strided_slice %113 {offsets = [0, 32], sizes = [2, 32], strides = [1, 1]} : vector<2x128xf32> to vector<2x32xf32>
    %116 = vector.extract_strided_slice %113 {offsets = [0, 96], sizes = [2, 32], strides = [1, 1]} : vector<2x128xf32> to vector<2x32xf32>
    %117 = vector.extract_strided_slice %108 {offsets = [0, 64], sizes = [2, 32], strides = [1, 1]} : vector<2x128xf32> to vector<2x32xf32>
    %118 = math.tanh %117 : vector<2x32xf32>
    %119 = arith.mulf %115, %102 : vector<2x32xf32>
    %120 = arith.mulf %114, %118 : vector<2x32xf32>
    %121 = arith.addf %119, %120 : vector<2x32xf32>
    %122 = math.tanh %121 : vector<2x32xf32>
    %123 = arith.mulf %116, %122 : vector<2x32xf32>
    %c10 = arith.constant 10 : index
    %c0_31 = arith.constant 0 : index
    %124 = vector.load %arg14[%c10, %c0_31] : memref<16x32xf32, #tpu.memory_space<vmem>>, vector<2x32xf32>
    tpu.vector_store %arg14[%c10, %c0_31], %123 {strides = array<i32>} : memref<16x32xf32, #tpu.memory_space<vmem>>, vector<2x32xf32>,
    %125 = vector.extract_strided_slice %6 {offsets = [12, 0], sizes = [2, 128], strides = [1, 1]} : vector<16x128xf32> to vector<2x128xf32>
    %cst_32 = arith.constant dense<0.000000e+00> : vector<2x128xf32>
    %126 = tpu.matmul %123, %1, %cst_32 {dimension_numbers = #tpu.dot_dimension_numbers<[1], [0], [0], [1], [0, 0, 1, 1], [], []>} : vector<2x32xf32>, vector<32x128xf32>, vector<2x128xf32> -> vector<2x128xf32>
    %127 = arith.addf %125, %126 : vector<2x128xf32>
    %128 = arith.negf %127 : vector<2x128xf32>
    %129 = math.exp %128 : vector<2x128xf32>
    %cst_33 = arith.constant 1.000000e+00 : f32
    %130 = vector.broadcast %cst_33 : f32 to vector<2x128xf32>
    %131 = arith.addf %130, %129 : vector<2x128xf32>
    %132 = arith.divf %130, %131 : vector<2x128xf32>
    %133 = vector.extract_strided_slice %132 {offsets = [0, 0], sizes = [2, 32], strides = [1, 1]} : vector<2x128xf32> to vector<2x32xf32>
    %134 = vector.extract_strided_slice %132 {offsets = [0, 32], sizes = [2, 32], strides = [1, 1]} : vector<2x128xf32> to vector<2x32xf32>
    %135 = vector.extract_strided_slice %132 {offsets = [0, 96], sizes = [2, 32], strides = [1, 1]} : vector<2x128xf32> to vector<2x32xf32>
    %136 = vector.extract_strided_slice %127 {offsets = [0, 64], sizes = [2, 32], strides = [1, 1]} : vector<2x128xf32> to vector<2x32xf32>
    %137 = math.tanh %136 : vector<2x32xf32>
    %138 = arith.mulf %134, %121 : vector<2x32xf32>
    %139 = arith.mulf %133, %137 : vector<2x32xf32>
    %140 = arith.addf %138, %139 : vector<2x32xf32>
    %141 = math.tanh %140 : vector<2x32xf32>
    %142 = arith.mulf %135, %141 : vector<2x32xf32>
    %c12 = arith.constant 12 : index
    %c0_34 = arith.constant 0 : index
    %143 = vector.load %arg14[%c12, %c0_34] : memref<16x32xf32, #tpu.memory_space<vmem>>, vector<2x32xf32>
    tpu.vector_store %arg14[%c12, %c0_34], %142 {strides = array<i32>} : memref<16x32xf32, #tpu.memory_space<vmem>>, vector<2x32xf32>,
    %144 = vector.extract_strided_slice %6 {offsets = [14, 0], sizes = [2, 128], strides = [1, 1]} : vector<16x128xf32> to vector<2x128xf32>
    %cst_35 = arith.constant dense<0.000000e+00> : vector<2x128xf32>
    %145 = tpu.matmul %142, %1, %cst_35 {dimension_numbers = #tpu.dot_dimension_numbers<[1], [0], [0], [1], [0, 0, 1, 1], [], []>} : vector<2x32xf32>, vector<32x128xf32>, vector<2x128xf32> -> vector<2x128xf32>
    %146 = arith.addf %144, %145 : vector<2x128xf32>
    %147 = arith.negf %146 : vector<2x128xf32>
    %148 = math.exp %147 : vector<2x128xf32>
    %cst_36 = arith.constant 1.000000e+00 : f32
    %149 = vector.broadcast %cst_36 : f32 to vector<2x128xf32>
    %150 = arith.addf %149, %148 : vector<2x128xf32>
    %151 = arith.divf %149, %150 : vector<2x128xf32>
    %152 = vector.extract_strided_slice %151 {offsets = [0, 0], sizes = [2, 32], strides = [1, 1]} : vector<2x128xf32> to vector<2x32xf32>
    %153 = vector.extract_strided_slice %151 {offsets = [0, 32], sizes = [2, 32], strides = [1, 1]} : vector<2x128xf32> to vector<2x32xf32>
    %154 = vector.extract_strided_slice %151 {offsets = [0, 96], sizes = [2, 32], strides = [1, 1]} : vector<2x128xf32> to vector<2x32xf32>
    %155 = vector.extract_strided_slice %146 {offsets = [0, 64], sizes = [2, 32], strides = [1, 1]} : vector<2x128xf32> to vector<2x32xf32>
    %156 = math.tanh %155 : vector<2x32xf32>
    %157 = arith.mulf %153, %140 : vector<2x32xf32>
    %158 = arith.mulf %152, %156 : vector<2x32xf32>
    %159 = arith.addf %157, %158 : vector<2x32xf32>
    %160 = math.tanh %159 : vector<2x32xf32>
    %161 = arith.mulf %154, %160 : vector<2x32xf32>
    %c14 = arith.constant 14 : index
    %c0_37 = arith.constant 0 : index
    %162 = vector.load %arg14[%c14, %c0_37] : memref<16x32xf32, #tpu.memory_space<vmem>>, vector<2x32xf32>
    tpu.vector_store %arg14[%c14, %c0_37], %161 {strides = array<i32>} : memref<16x32xf32, #tpu.memory_space<vmem>>, vector<2x32xf32>,
    %c0_38 = arith.constant 0 : index
    %c0_39 = arith.constant 0 : index
    %c0_40 = arith.constant 0 : index
    %163 = vector.load %arg12[%c0_38, %c0_39, %c0_40] : memref<2x2x32xf32, #tpu.memory_space<vmem>>, vector<1x2x32xf32>
    %164 = vector.shape_cast %163 : vector<1x2x32xf32> to vector<2x32xf32>
    %165 = vector.shape_cast %161 : vector<2x32xf32> to vector<1x2x32xf32>
    tpu.vector_store %arg12[%c0_38, %c0_39, %c0_40], %165 {strides = array<i32>} : memref<2x2x32xf32, #tpu.memory_space<vmem>>, vector<1x2x32xf32>,
    %c0_41 = arith.constant 0 : index
    %c0_42 = arith.constant 0 : index
    %c0_43 = arith.constant 0 : index
    %166 = vector.load %arg13[%c0_41, %c0_42, %c0_43] : memref<2x2x32xf32, #tpu.memory_space<vmem>>, vector<1x2x32xf32>
    %167 = vector.shape_cast %166 : vector<1x2x32xf32> to vector<2x32xf32>
    %168 = vector.shape_cast %159 : vector<2x32xf32> to vector<1x2x32xf32>
    tpu.vector_store %arg13[%c0_41, %c0_42, %c0_43], %168 {strides = array<i32>} : memref<2x2x32xf32, #tpu.memory_space<vmem>>, vector<1x2x32xf32>,
    %c0_44 = arith.constant 0 : index
    %c0_45 = arith.constant 0 : index
    %169 = vector.load %arg6[%c0_44, %c0_45] : memref<32x128xf32, #tpu.memory_space<vmem>>, vector<32x128xf32>
    %c0_46 = arith.constant 0 : index
    %c0_47 = arith.constant 0 : index
    %170 = vector.load %arg7[%c0_46, %c0_47] : memref<32x128xf32, #tpu.memory_space<vmem>>, vector<32x128xf32>
    %c0_48 = arith.constant 0 : index
    %c0_49 = arith.constant 0 : index
    %171 = vector.load %arg8[%c0_48, %c0_49] : memref<1x128xf32, #tpu.memory_space<vmem>>, vector<1x128xf32>
    %c0_50 = arith.constant 0 : index
    %c0_51 = arith.constant 0 : index
    %172 = vector.load %arg14[%c0_50, %c0_51] : memref<16x32xf32, #tpu.memory_space<vmem>>, vector<16x32xf32>
    %cst_52 = arith.constant dense<0.000000e+00> : vector<16x128xf32>
    %173 = tpu.matmul %172, %169, %cst_52 {dimension_numbers = #tpu.dot_dimension_numbers<[1], [0], [0], [1], [0, 0, 1, 1], [], []>} : vector<16x32xf32>, vector<32x128xf32>, vector<16x128xf32> -> vector<16x128xf32>
    %174 = vector.broadcast %171 : vector<1x128xf32> to vector<16x128xf32>
    %175 = arith.addf %173, %174 : vector<16x128xf32>
    %c1 = arith.constant 1 : index
    %c0_53 = arith.constant 0 : index
    %c0_54 = arith.constant 0 : index
    %176 = vector.load %arg1[%c1, %c0_53, %c0_54] : memref<2x2x32xf32, #tpu.memory_space<vmem>>, vector<1x2x32xf32>
    %177 = vector.shape_cast %176 : vector<1x2x32xf32> to vector<2x32xf32>
    %c1_55 = arith.constant 1 : index
    %c0_56 = arith.constant 0 : index
    %c0_57 = arith.constant 0 : index
    %178 = vector.load %arg2[%c1_55, %c0_56, %c0_57] : memref<2x2x32xf32, #tpu.memory_space<vmem>>, vector<1x2x32xf32>
    %179 = vector.shape_cast %178 : vector<1x2x32xf32> to vector<2x32xf32>
    %180 = vector.extract_strided_slice %175 {offsets = [0, 0], sizes = [2, 128], strides = [1, 1]} : vector<16x128xf32> to vector<2x128xf32>
    %cst_58 = arith.constant dense<0.000000e+00> : vector<2x128xf32>
    %181 = tpu.matmul %177, %170, %cst_58 {dimension_numbers = #tpu.dot_dimension_numbers<[1], [0], [0], [1], [0, 0, 1, 1], [], []>} : vector<2x32xf32>, vector<32x128xf32>, vector<2x128xf32> -> vector<2x128xf32>
    %182 = arith.addf %180, %181 : vector<2x128xf32>
    %183 = arith.negf %182 : vector<2x128xf32>
    %184 = math.exp %183 : vector<2x128xf32>
    %cst_59 = arith.constant 1.000000e+00 : f32
    %185 = vector.broadcast %cst_59 : f32 to vector<2x128xf32>
    %186 = arith.addf %185, %184 : vector<2x128xf32>
    %187 = arith.divf %185, %186 : vector<2x128xf32>
    %188 = vector.extract_strided_slice %187 {offsets = [0, 0], sizes = [2, 32], strides = [1, 1]} : vector<2x128xf32> to vector<2x32xf32>
    %189 = vector.extract_strided_slice %187 {offsets = [0, 32], sizes = [2, 32], strides = [1, 1]} : vector<2x128xf32> to vector<2x32xf32>
    %190 = vector.extract_strided_slice %187 {offsets = [0, 96], sizes = [2, 32], strides = [1, 1]} : vector<2x128xf32> to vector<2x32xf32>
    %191 = vector.extract_strided_slice %182 {offsets = [0, 64], sizes = [2, 32], strides = [1, 1]} : vector<2x128xf32> to vector<2x32xf32>
    %192 = math.tanh %191 : vector<2x32xf32>
    %193 = arith.mulf %189, %179 : vector<2x32xf32>
    %194 = arith.mulf %188, %192 : vector<2x32xf32>
    %195 = arith.addf %193, %194 : vector<2x32xf32>
    %196 = math.tanh %195 : vector<2x32xf32>
    %197 = arith.mulf %190, %196 : vector<2x32xf32>
    %198 = vector.extract_strided_slice %175 {offsets = [2, 0], sizes = [2, 128], strides = [1, 1]} : vector<16x128xf32> to vector<2x128xf32>
    %cst_60 = arith.constant dense<0.000000e+00> : vector<2x128xf32>
    %199 = tpu.matmul %197, %170, %cst_60 {dimension_numbers = #tpu.dot_dimension_numbers<[1], [0], [0], [1], [0, 0, 1, 1], [], []>} : vector<2x32xf32>, vector<32x128xf32>, vector<2x128xf32> -> vector<2x128xf32>
    %200 = arith.addf %198, %199 : vector<2x128xf32>
    %201 = arith.negf %200 : vector<2x128xf32>
    %202 = math.exp %201 : vector<2x128xf32>
    %cst_61 = arith.constant 1.000000e+00 : f32
    %203 = vector.broadcast %cst_61 : f32 to vector<2x128xf32>
    %204 = arith.addf %203, %202 : vector<2x128xf32>
    %205 = arith.divf %203, %204 : vector<2x128xf32>
    %206 = vector.extract_strided_slice %205 {offsets = [0, 0], sizes = [2, 32], strides = [1, 1]} : vector<2x128xf32> to vector<2x32xf32>
    %207 = vector.extract_strided_slice %205 {offsets = [0, 32], sizes = [2, 32], strides = [1, 1]} : vector<2x128xf32> to vector<2x32xf32>
    %208 = vector.extract_strided_slice %205 {offsets = [0, 96], sizes = [2, 32], strides = [1, 1]} : vector<2x128xf32> to vector<2x32xf32>
    %209 = vector.extract_strided_slice %200 {offsets = [0, 64], sizes = [2, 32], strides = [1, 1]} : vector<2x128xf32> to vector<2x32xf32>
    %210 = math.tanh %209 : vector<2x32xf32>
    %211 = arith.mulf %207, %195 : vector<2x32xf32>
    %212 = arith.mulf %206, %210 : vector<2x32xf32>
    %213 = arith.addf %211, %212 : vector<2x32xf32>
    %214 = math.tanh %213 : vector<2x32xf32>
    %215 = arith.mulf %208, %214 : vector<2x32xf32>
    %216 = vector.extract_strided_slice %175 {offsets = [4, 0], sizes = [2, 128], strides = [1, 1]} : vector<16x128xf32> to vector<2x128xf32>
    %cst_62 = arith.constant dense<0.000000e+00> : vector<2x128xf32>
    %217 = tpu.matmul %215, %170, %cst_62 {dimension_numbers = #tpu.dot_dimension_numbers<[1], [0], [0], [1], [0, 0, 1, 1], [], []>} : vector<2x32xf32>, vector<32x128xf32>, vector<2x128xf32> -> vector<2x128xf32>
    %218 = arith.addf %216, %217 : vector<2x128xf32>
    %219 = arith.negf %218 : vector<2x128xf32>
    %220 = math.exp %219 : vector<2x128xf32>
    %cst_63 = arith.constant 1.000000e+00 : f32
    %221 = vector.broadcast %cst_63 : f32 to vector<2x128xf32>
    %222 = arith.addf %221, %220 : vector<2x128xf32>
    %223 = arith.divf %221, %222 : vector<2x128xf32>
    %224 = vector.extract_strided_slice %223 {offsets = [0, 0], sizes = [2, 32], strides = [1, 1]} : vector<2x128xf32> to vector<2x32xf32>
    %225 = vector.extract_strided_slice %223 {offsets = [0, 32], sizes = [2, 32], strides = [1, 1]} : vector<2x128xf32> to vector<2x32xf32>
    %226 = vector.extract_strided_slice %223 {offsets = [0, 96], sizes = [2, 32], strides = [1, 1]} : vector<2x128xf32> to vector<2x32xf32>
    %227 = vector.extract_strided_slice %218 {offsets = [0, 64], sizes = [2, 32], strides = [1, 1]} : vector<2x128xf32> to vector<2x32xf32>
    %228 = math.tanh %227 : vector<2x32xf32>
    %229 = arith.mulf %225, %213 : vector<2x32xf32>
    %230 = arith.mulf %224, %228 : vector<2x32xf32>
    %231 = arith.addf %229, %230 : vector<2x32xf32>
    %232 = math.tanh %231 : vector<2x32xf32>
    %233 = arith.mulf %226, %232 : vector<2x32xf32>
    %234 = vector.extract_strided_slice %175 {offsets = [6, 0], sizes = [2, 128], strides = [1, 1]} : vector<16x128xf32> to vector<2x128xf32>
    %cst_64 = arith.constant dense<0.000000e+00> : vector<2x128xf32>
    %235 = tpu.matmul %233, %170, %cst_64 {dimension_numbers = #tpu.dot_dimension_numbers<[1], [0], [0], [1], [0, 0, 1, 1], [], []>} : vector<2x32xf32>, vector<32x128xf32>, vector<2x128xf32> -> vector<2x128xf32>
    %236 = arith.addf %234, %235 : vector<2x128xf32>
    %237 = arith.negf %236 : vector<2x128xf32>
    %238 = math.exp %237 : vector<2x128xf32>
    %cst_65 = arith.constant 1.000000e+00 : f32
    %239 = vector.broadcast %cst_65 : f32 to vector<2x128xf32>
    %240 = arith.addf %239, %238 : vector<2x128xf32>
    %241 = arith.divf %239, %240 : vector<2x128xf32>
    %242 = vector.extract_strided_slice %241 {offsets = [0, 0], sizes = [2, 32], strides = [1, 1]} : vector<2x128xf32> to vector<2x32xf32>
    %243 = vector.extract_strided_slice %241 {offsets = [0, 32], sizes = [2, 32], strides = [1, 1]} : vector<2x128xf32> to vector<2x32xf32>
    %244 = vector.extract_strided_slice %241 {offsets = [0, 96], sizes = [2, 32], strides = [1, 1]} : vector<2x128xf32> to vector<2x32xf32>
    %245 = vector.extract_strided_slice %236 {offsets = [0, 64], sizes = [2, 32], strides = [1, 1]} : vector<2x128xf32> to vector<2x32xf32>
    %246 = math.tanh %245 : vector<2x32xf32>
    %247 = arith.mulf %243, %231 : vector<2x32xf32>
    %248 = arith.mulf %242, %246 : vector<2x32xf32>
    %249 = arith.addf %247, %248 : vector<2x32xf32>
    %250 = math.tanh %249 : vector<2x32xf32>
    %251 = arith.mulf %244, %250 : vector<2x32xf32>
    %252 = vector.extract_strided_slice %175 {offsets = [8, 0], sizes = [2, 128], strides = [1, 1]} : vector<16x128xf32> to vector<2x128xf32>
    %cst_66 = arith.constant dense<0.000000e+00> : vector<2x128xf32>
    %253 = tpu.matmul %251, %170, %cst_66 {dimension_numbers = #tpu.dot_dimension_numbers<[1], [0], [0], [1], [0, 0, 1, 1], [], []>} : vector<2x32xf32>, vector<32x128xf32>, vector<2x128xf32> -> vector<2x128xf32>
    %254 = arith.addf %252, %253 : vector<2x128xf32>
    %255 = arith.negf %254 : vector<2x128xf32>
    %256 = math.exp %255 : vector<2x128xf32>
    %cst_67 = arith.constant 1.000000e+00 : f32
    %257 = vector.broadcast %cst_67 : f32 to vector<2x128xf32>
    %258 = arith.addf %257, %256 : vector<2x128xf32>
    %259 = arith.divf %257, %258 : vector<2x128xf32>
    %260 = vector.extract_strided_slice %259 {offsets = [0, 0], sizes = [2, 32], strides = [1, 1]} : vector<2x128xf32> to vector<2x32xf32>
    %261 = vector.extract_strided_slice %259 {offsets = [0, 32], sizes = [2, 32], strides = [1, 1]} : vector<2x128xf32> to vector<2x32xf32>
    %262 = vector.extract_strided_slice %259 {offsets = [0, 96], sizes = [2, 32], strides = [1, 1]} : vector<2x128xf32> to vector<2x32xf32>
    %263 = vector.extract_strided_slice %254 {offsets = [0, 64], sizes = [2, 32], strides = [1, 1]} : vector<2x128xf32> to vector<2x32xf32>
    %264 = math.tanh %263 : vector<2x32xf32>
    %265 = arith.mulf %261, %249 : vector<2x32xf32>
    %266 = arith.mulf %260, %264 : vector<2x32xf32>
    %267 = arith.addf %265, %266 : vector<2x32xf32>
    %268 = math.tanh %267 : vector<2x32xf32>
    %269 = arith.mulf %262, %268 : vector<2x32xf32>
    %270 = vector.extract_strided_slice %175 {offsets = [10, 0], sizes = [2, 128], strides = [1, 1]} : vector<16x128xf32> to vector<2x128xf32>
    %cst_68 = arith.constant dense<0.000000e+00> : vector<2x128xf32>
    %271 = tpu.matmul %269, %170, %cst_68 {dimension_numbers = #tpu.dot_dimension_numbers<[1], [0], [0], [1], [0, 0, 1, 1], [], []>} : vector<2x32xf32>, vector<32x128xf32>, vector<2x128xf32> -> vector<2x128xf32>
    %272 = arith.addf %270, %271 : vector<2x128xf32>
    %273 = arith.negf %272 : vector<2x128xf32>
    %274 = math.exp %273 : vector<2x128xf32>
    %cst_69 = arith.constant 1.000000e+00 : f32
    %275 = vector.broadcast %cst_69 : f32 to vector<2x128xf32>
    %276 = arith.addf %275, %274 : vector<2x128xf32>
    %277 = arith.divf %275, %276 : vector<2x128xf32>
    %278 = vector.extract_strided_slice %277 {offsets = [0, 0], sizes = [2, 32], strides = [1, 1]} : vector<2x128xf32> to vector<2x32xf32>
    %279 = vector.extract_strided_slice %277 {offsets = [0, 32], sizes = [2, 32], strides = [1, 1]} : vector<2x128xf32> to vector<2x32xf32>
    %280 = vector.extract_strided_slice %277 {offsets = [0, 96], sizes = [2, 32], strides = [1, 1]} : vector<2x128xf32> to vector<2x32xf32>
    %281 = vector.extract_strided_slice %272 {offsets = [0, 64], sizes = [2, 32], strides = [1, 1]} : vector<2x128xf32> to vector<2x32xf32>
    %282 = math.tanh %281 : vector<2x32xf32>
    %283 = arith.mulf %279, %267 : vector<2x32xf32>
    %284 = arith.mulf %278, %282 : vector<2x32xf32>
    %285 = arith.addf %283, %284 : vector<2x32xf32>
    %286 = math.tanh %285 : vector<2x32xf32>
    %287 = arith.mulf %280, %286 : vector<2x32xf32>
    %288 = vector.extract_strided_slice %175 {offsets = [12, 0], sizes = [2, 128], strides = [1, 1]} : vector<16x128xf32> to vector<2x128xf32>
    %cst_70 = arith.constant dense<0.000000e+00> : vector<2x128xf32>
    %289 = tpu.matmul %287, %170, %cst_70 {dimension_numbers = #tpu.dot_dimension_numbers<[1], [0], [0], [1], [0, 0, 1, 1], [], []>} : vector<2x32xf32>, vector<32x128xf32>, vector<2x128xf32> -> vector<2x128xf32>
    %290 = arith.addf %288, %289 : vector<2x128xf32>
    %291 = arith.negf %290 : vector<2x128xf32>
    %292 = math.exp %291 : vector<2x128xf32>
    %cst_71 = arith.constant 1.000000e+00 : f32
    %293 = vector.broadcast %cst_71 : f32 to vector<2x128xf32>
    %294 = arith.addf %293, %292 : vector<2x128xf32>
    %295 = arith.divf %293, %294 : vector<2x128xf32>
    %296 = vector.extract_strided_slice %295 {offsets = [0, 0], sizes = [2, 32], strides = [1, 1]} : vector<2x128xf32> to vector<2x32xf32>
    %297 = vector.extract_strided_slice %295 {offsets = [0, 32], sizes = [2, 32], strides = [1, 1]} : vector<2x128xf32> to vector<2x32xf32>
    %298 = vector.extract_strided_slice %295 {offsets = [0, 96], sizes = [2, 32], strides = [1, 1]} : vector<2x128xf32> to vector<2x32xf32>
    %299 = vector.extract_strided_slice %290 {offsets = [0, 64], sizes = [2, 32], strides = [1, 1]} : vector<2x128xf32> to vector<2x32xf32>
    %300 = math.tanh %299 : vector<2x32xf32>
    %301 = arith.mulf %297, %285 : vector<2x32xf32>
    %302 = arith.mulf %296, %300 : vector<2x32xf32>
    %303 = arith.addf %301, %302 : vector<2x32xf32>
    %304 = math.tanh %303 : vector<2x32xf32>
    %305 = arith.mulf %298, %304 : vector<2x32xf32>
    %306 = vector.extract_strided_slice %175 {offsets = [14, 0], sizes = [2, 128], strides = [1, 1]} : vector<16x128xf32> to vector<2x128xf32>
    %cst_72 = arith.constant dense<0.000000e+00> : vector<2x128xf32>
    %307 = tpu.matmul %305, %170, %cst_72 {dimension_numbers = #tpu.dot_dimension_numbers<[1], [0], [0], [1], [0, 0, 1, 1], [], []>} : vector<2x32xf32>, vector<32x128xf32>, vector<2x128xf32> -> vector<2x128xf32>
    %308 = arith.addf %306, %307 : vector<2x128xf32>
    %309 = arith.negf %308 : vector<2x128xf32>
    %310 = math.exp %309 : vector<2x128xf32>
    %cst_73 = arith.constant 1.000000e+00 : f32
    %311 = vector.broadcast %cst_73 : f32 to vector<2x128xf32>
    %312 = arith.addf %311, %310 : vector<2x128xf32>
    %313 = arith.divf %311, %312 : vector<2x128xf32>
    %314 = vector.extract_strided_slice %313 {offsets = [0, 0], sizes = [2, 32], strides = [1, 1]} : vector<2x128xf32> to vector<2x32xf32>
    %315 = vector.extract_strided_slice %313 {offsets = [0, 32], sizes = [2, 32], strides = [1, 1]} : vector<2x128xf32> to vector<2x32xf32>
    %316 = vector.extract_strided_slice %313 {offsets = [0, 96], sizes = [2, 32], strides = [1, 1]} : vector<2x128xf32> to vector<2x32xf32>
    %317 = vector.extract_strided_slice %308 {offsets = [0, 64], sizes = [2, 32], strides = [1, 1]} : vector<2x128xf32> to vector<2x32xf32>
    %318 = math.tanh %317 : vector<2x32xf32>
    %319 = arith.mulf %315, %303 : vector<2x32xf32>
    %320 = arith.mulf %314, %318 : vector<2x32xf32>
    %321 = arith.addf %319, %320 : vector<2x32xf32>
    %322 = math.tanh %321 : vector<2x32xf32>
    %323 = arith.mulf %316, %322 : vector<2x32xf32>
    %c1_74 = arith.constant 1 : index
    %c0_75 = arith.constant 0 : index
    %c0_76 = arith.constant 0 : index
    %324 = vector.load %arg12[%c1_74, %c0_75, %c0_76] : memref<2x2x32xf32, #tpu.memory_space<vmem>>, vector<1x2x32xf32>
    %325 = vector.shape_cast %324 : vector<1x2x32xf32> to vector<2x32xf32>
    %326 = vector.shape_cast %323 : vector<2x32xf32> to vector<1x2x32xf32>
    tpu.vector_store %arg12[%c1_74, %c0_75, %c0_76], %326 {strides = array<i32>} : memref<2x2x32xf32, #tpu.memory_space<vmem>>, vector<1x2x32xf32>,
    %c1_77 = arith.constant 1 : index
    %c0_78 = arith.constant 0 : index
    %c0_79 = arith.constant 0 : index
    %327 = vector.load %arg13[%c1_77, %c0_78, %c0_79] : memref<2x2x32xf32, #tpu.memory_space<vmem>>, vector<1x2x32xf32>
    %328 = vector.shape_cast %327 : vector<1x2x32xf32> to vector<2x32xf32>
    %329 = vector.shape_cast %321 : vector<2x32xf32> to vector<1x2x32xf32>
    tpu.vector_store %arg13[%c1_77, %c0_78, %c0_79], %329 {strides = array<i32>} : memref<2x2x32xf32, #tpu.memory_space<vmem>>, vector<1x2x32xf32>,
    %c0_80 = arith.constant 0 : index
    %c0_81 = arith.constant 0 : index
    %330 = vector.load %arg9[%c0_80, %c0_81] : memref<32x4xf32, #tpu.memory_space<vmem>>, vector<32x4xf32>
    %cst_82 = arith.constant dense<0.000000e+00> : vector<2x4xf32>
    %331 = tpu.matmul %323, %330, %cst_82 {dimension_numbers = #tpu.dot_dimension_numbers<[1], [0], [0], [1], [0, 0, 1, 1], [], []>} : vector<2x32xf32>, vector<32x4xf32>, vector<2x4xf32> -> vector<2x4xf32>
    %c0_83 = arith.constant 0 : index
    %c0_84 = arith.constant 0 : index
    %332 = vector.load %arg10[%c0_83, %c0_84] : memref<1x4xf32, #tpu.memory_space<vmem>>, vector<1x4xf32>
    %333 = vector.broadcast %332 : vector<1x4xf32> to vector<2x4xf32>
    %334 = arith.addf %331, %333 : vector<2x4xf32>
    %335 = arith.negf %334 : vector<2x4xf32>
    %336 = math.exp %335 : vector<2x4xf32>
    %cst_85 = arith.constant 1.000000e+00 : f32
    %337 = vector.broadcast %cst_85 : f32 to vector<2x4xf32>
    %338 = arith.addf %337, %336 : vector<2x4xf32>
    %339 = arith.divf %337, %338 : vector<2x4xf32>
    %c0_86 = arith.constant 0 : index
    %c0_87 = arith.constant 0 : index
    %340 = vector.load %arg11[%c0_86, %c0_87] : memref<2x4xf32, #tpu.memory_space<vmem>>, vector<2x4xf32>
    tpu.vector_store %arg11[%c0_86, %c0_87], %339 {strides = array<i32>} : memref<2x4xf32, #tpu.memory_space<vmem>>, vector<2x4xf32>,
    return
  }
}

</mosaic_0001>

<llo_original>
// kernel: lstm_model_forward.1
$region0: #{lstm_model_forward.1}
  #allocation0 [shape = 'u32[]', space=smem, size = 0x4, offset = 0x4, fixed_abs, tag = 'smem constant byte address 0x4 - core index']
  #allocation1 [shape = 'u32[72,128]{1,0:T(1,128)}', space=vmem, size = 0x9000, scoped, tag = 'internal scratch']
  #allocation2 [shape = 'f32[16,32]{1,0:T(8,128)}', space=vmem, size = 0x2000, scoped, tag = 'scratch operand']
  %s0 = inlined_call_operand.vmem [shape: f32[16,32], index: 0, kind: input, shape index: {}]
  %s1 = inlined_call_operand.vmem [shape: f32[2,2,32], index: 1, kind: input, shape index: {}]
  %s2 = inlined_call_operand.vmem [shape: f32[2,2,32], index: 2, kind: input, shape index: {}]
  %s3 = inlined_call_operand.vmem [shape: f32[32,128], index: 3, kind: input, shape index: {}]
  %s4 = inlined_call_operand.vmem [shape: f32[32,128], index: 4, kind: input, shape index: {}]
  %s5 = inlined_call_operand.vmem [shape: f32[1,128], index: 5, kind: input, shape index: {}]
  %s6 = inlined_call_operand.vmem [shape: f32[32,128], index: 6, kind: input, shape index: {}]
  %s7 = inlined_call_operand.vmem [shape: f32[32,128], index: 7, kind: input, shape index: {}]
  %s8 = inlined_call_operand.vmem [shape: f32[1,128], index: 8, kind: input, shape index: {}]
  %s9 = inlined_call_operand.vmem [shape: f32[32,4], index: 9, kind: input, shape index: {}]
  %s10 = inlined_call_operand.vmem [shape: f32[1,4], index: 10, kind: input, shape index: {}]
  %s11 = inlined_call_operand.vmem [shape: f32[2,4], index: 11, kind: output, shape index: {0}]
  %s12 = inlined_call_operand.hbm [shape: f32[2,2,32], index: 12, kind: output, shape index: {1}]
  %s13 = inlined_call_operand.hbm [shape: f32[2,2,32], index: 13, kind: output, shape index: {2}]
  %14 = xla_tuple %s11, %s12, %s13
  %s15 = sld [smem:[#allocation0]]
  $region70: #{lstm_model_forward.1} parent=0
    _
  %s17 = ssub.s32 1, %s15
  %s18 = scalar_select 0, %s17, %s15
  $region1: #{lstm_model_forward.1} parent=0
    #allocation3 [shape = 'u8[2048]{0}', space=vmem, size = 0x800, scoped, tag = 'output window, operand 1, single buffered']
    #allocation4 [shape = 's32[1]{0}', space=sflag, size = 0x4, scoped, tag = 'scoped memory for lstm_model_forward.1']
    #allocation5 [shape = 'u8[2048]{0}', space=vmem, size = 0x800, scoped, tag = 'output window, operand 2, single buffered']
    #allocation6 [shape = 's32[1]{0}', space=sflag, size = 0x4, scoped, tag = 'scoped memory for lstm_model_forward.1']
    %19 = vsyncpa [#allocation4], 0
    %20 = vsyncpa [#allocation6], 0
    // Predicated region
    $region2: #{lstm_model_forward.1} parent=1 // pred_check
      _
    $region3: #{lstm_model_forward.1} parent=1 // pred_check_branch
      %22 = sbr.rel (0) target = $region5
    $region4: #{lstm_model_forward.1} parent=1 // pred_region
      _
    $region5: #{lstm_model_forward.1} parent=1 // pred_fallthru
      _
    // Predicated region
    $region6: #{lstm_model_forward.1} parent=1 // pred_check
      _
    $region7: #{lstm_model_forward.1} parent=1 // pred_check_branch
      %24 = sbr.rel (0) target = $region9
    $region8: #{lstm_model_forward.1} parent=1 // pred_region
      _
    $region9: #{lstm_model_forward.1} parent=1 // pred_fallthru
      _
    // Predicated region
    $region10: #{lstm_model_forward.1} parent=1 // pred_check
      _
    $region11: #{lstm_model_forward.1} parent=1 // pred_check_branch
      %26 = sbr.rel (0) target = $region13
    $region12: #{lstm_model_forward.1} parent=1 // pred_region
      _
    $region13: #{lstm_model_forward.1} parent=1 // pred_fallthru
      _
    // Predicated region
    $region14: #{lstm_model_forward.1} parent=1 // pred_check
      _
    $region15: #{lstm_model_forward.1} parent=1 // pred_check_branch
      %28 = sbr.rel (0) target = $region17
    $region16: #{lstm_model_forward.1} parent=1 // pred_region
      _
    $region17: #{lstm_model_forward.1} parent=1 // pred_fallthru
      _
    // Predicated region
    $region18: #{lstm_model_forward.1} parent=1 // pred_check
      _
    $region19: #{lstm_model_forward.1} parent=1 // pred_check_branch
      %30 = sbr.rel (0) target = $region21
    $region20: #{lstm_model_forward.1} parent=1 // pred_region
      _
    $region21: #{lstm_model_forward.1} parent=1 // pred_fallthru
      _
    // Predicated region
    $region22: #{lstm_model_forward.1} parent=1 // pred_check
      _
    $region23: #{lstm_model_forward.1} parent=1 // pred_check_branch
      %32 = sbr.rel (0) target = $region25
    $region24: #{lstm_model_forward.1} parent=1 // pred_region
      _
    $region25: #{lstm_model_forward.1} parent=1 // pred_fallthru
      _
    // Predicated region
    $region26: #{lstm_model_forward.1} parent=1 // pred_check
      _
    $region27: #{lstm_model_forward.1} parent=1 // pred_check_branch
      %34 = sbr.rel (0) target = $region29
    $region28: #{lstm_model_forward.1} parent=1 // pred_region
      _
    $region29: #{lstm_model_forward.1} parent=1 // pred_fallthru
      _
    // Predicated region
    $region30: #{lstm_model_forward.1} parent=1 // pred_check
      _
    $region31: #{lstm_model_forward.1} parent=1 // pred_check_branch
      %36 = sbr.rel (0) target = $region33
    $region32: #{lstm_model_forward.1} parent=1 // pred_region
      _
    $region33: #{lstm_model_forward.1} parent=1 // pred_fallthru
      _
    // Predicated region
    $region34: #{lstm_model_forward.1} parent=1 // pred_check
      _
    $region35: #{lstm_model_forward.1} parent=1 // pred_check_branch
      %38 = sbr.rel (0) target = $region37
    $region36: #{lstm_model_forward.1} parent=1 // pred_region
      _
    $region37: #{lstm_model_forward.1} parent=1 // pred_fallthru
      _
    // Predicated region
    $region38: #{lstm_model_forward.1} parent=1 // pred_check
      _
    $region39: #{lstm_model_forward.1} parent=1 // pred_check_branch
      %40 = sbr.rel (0) target = $region41
    $region40: #{lstm_model_forward.1} parent=1 // pred_region
      _
    $region41: #{lstm_model_forward.1} parent=1 // pred_fallthru
      _
    // Predicated region
    $region42: #{lstm_model_forward.1} parent=1 // pred_check
      _
    $region43: #{lstm_model_forward.1} parent=1 // pred_check_branch
      %42 = sbr.rel (0) target = $region45
    $region44: #{lstm_model_forward.1} parent=1 // pred_region
      _
    $region45: #{lstm_model_forward.1} parent=1 // pred_fallthru
      _
    %v43 = vld [vmem:[%s3] sm:$0xff]
    %v44 = vld [vmem:[%s3 + $0x8] sm:$0xff]
    %v45 = vld [vmem:[%s3 + $0x10] sm:$0xff]
    %v46 = vld [vmem:[%s3 + $0x18] sm:$0xff]
    %v47 = vld [vmem:[%s4] sm:$0xff]
    %v48 = vld [vmem:[%s4 + $0x8] sm:$0xff]
    %v49 = vld [vmem:[%s4 + $0x10] sm:$0xff]
    %v50 = vld [vmem:[%s4 + $0x18] sm:$0xff]
    %v51 = vld [vmem:[%s5] sm:$0x1]
    %v52 = vld [vmem:[%s0] sm:$0xff]
    %v53 = vld [vmem:[%s0 + $0x8] sm:$0xff]
    %v55 = vperm.slane %v51, 0
    %vm57 = vcmask 261120
    %v59 = vsel %vm57, %v52, 0
    %v62 = vsel %vm57, %v53, 0
    %64 = vmatpush.msra.mxu0 0.0
    %65 = vmatpush.msra.mxu0 0.0
    %66 = vmatpush.msra.mxu0 0.0
    %67 = vmatpush.msra.mxu0 0.0
    %68 = vmatpush.msra.mxu0 0.0
    %69 = vmatpush.msra.mxu0 0.0
    %70 = vmatpush.msra.mxu0 0.0
    %71 = vmatpush.msra.mxu0 0.0
    %72 = vmatpush.msra.mxu0 0.0
    %73 = vmatpush.msra.mxu0 0.0
    %74 = vmatpush.msra.mxu0 0.0
    %75 = vmatpush.msra.mxu0 0.0
    %76 = vmatpush.msra.mxu0 %v46
    %77 = vmatpush.msra.mxu0 %v45
    %78 = vmatpush.msra.mxu0 %v44
    %79 = vmatpush.msra.mxu0 %v43
    %80 = vmatmul.f32.gmra.mxu0 %v59
    %v81 = vpop.f32.mrf.mxu0
    %v82 = vadd.f32 %v55, %v81
    %83 = vmatmul.f32.gmra.mxu0 %v62
    %v84 = vpop.f32.mrf.mxu0
    %v85 = vadd.f32 %v55, %v84
    %86 = vdwg.mxu0
    %v87 = vld [vmem:[%s1] sm:$0x3]
    %v88 = vld [vmem:[%s2] sm:$0x3]
    %v90 = vsel %vm57, %v87, 0
    %92 = vmatpush.msra.mxu0 0.0
    %93 = vmatpush.msra.mxu0 0.0
    %94 = vmatpush.msra.mxu0 0.0
    %95 = vmatpush.msra.mxu0 0.0
    %96 = vmatpush.msra.mxu0 0.0
    %97 = vmatpush.msra.mxu0 0.0
    %98 = vmatpush.msra.mxu0 0.0
    %99 = vmatpush.msra.mxu0 0.0
    %100 = vmatpush.msra.mxu0 0.0
    %101 = vmatpush.msra.mxu0 0.0
    %102 = vmatpush.msra.mxu0 0.0
    %103 = vmatpush.msra.mxu0 0.0
    %104 = vmatpush.msra.mxu0 %v50
    %105 = vmatpush.msra.mxu0 %v49
    %106 = vmatpush.msra.mxu0 %v48
    %107 = vmatpush.msra.mxu0 %v47
    %108 = vmatmul.f32.gmra.mxu0 %v90
    %v109 = vpop.f32.mrf.mxu0
    %v110 = vadd.f32 0.0, %v109
    %111 = vdwg.mxu0
    %v112 = vadd.f32 %v82, %v110
    %v113 = vxor.u32 %v112, 2147483648
    %v114 = vmul.f32 %v113, 1.442695
    %v115 = vpow.pop %v114
    %v116 = vadd.f32 %v115, 1.0
    %v117 = vrcp.pop %v116
    %v118 = vmul.f32 %v116, %v117
    %v119 = vsub.f32 1.0, %v118
    %v120 = vmul.f32 %v117, %v119
    %v121 = vadd.f32 %v117, %v120
    %vm122 = vweird.f32 %v116
    %vm123 = vweird.f32 %v117
    %vm124 = vmor %vm122, %vm123
    %v125 = vsel %vm124, %v117, %v121
    %v126 = vand.u32 2147483647, %v116
    %vm127 = vcmp.eq.f32.partialorder %v126, 8.507059e+37
    %v128 = vand.u32 %v116, 2147483648
    %v129 = vor.u32 1.1754944e-38, %v128
    %v130 = vsel %vm127, %v129, %v125
    %v131 = vmul.f32 1.0, %v130
    %v132 = vtanh.pop %v112
    %134 = vrot.lane.b32.xlu0 %v88, 32
    %v135 = vpop.permute.xlu0 %134
    %v137 = vmul.f32 %v131, %v135
    %139 = vrot.lane.b32.xlu0 %v132, 64
    %v140 = vpop.permute.xlu0 %139
    %v142 = vmul.f32 %v131, %v140
    %144 = vrot.lane.b32.xlu0 %v142, 32
    %v145 = vpop.permute.xlu0 %144
    %v147 = vadd.f32 %v137, %v145
    %v148 = vtanh.pop %v147
    %150 = vrot.lane.b32.xlu0 %v148, 64
    %v151 = vpop.permute.xlu0 %150
    %v153 = vmul.f32 %v131, %v151
    %155 = vrot.lane.b32.xlu0 %v153, 32
    %v156 = vpop.permute.xlu0 %155
    %vm158 = vcmask 254976
    %159 = vst.msk [vmem:[#allocation2] sm:$0x3] %vm158, %v156
    %v160 = vsel %vm57, %v156, 0
    %162 = vmatpush.msra.mxu0 0.0
    %163 = vmatpush.msra.mxu0 0.0
    %164 = vmatpush.msra.mxu0 0.0
    %165 = vmatpush.msra.mxu0 0.0
    %166 = vmatpush.msra.mxu0 0.0
    %167 = vmatpush.msra.mxu0 0.0
    %168 = vmatpush.msra.mxu0 0.0
    %169 = vmatpush.msra.mxu0 0.0
    %170 = vmatpush.msra.mxu0 0.0
    %171 = vmatpush.msra.mxu0 0.0
    %172 = vmatpush.msra.mxu0 0.0
    %173 = vmatpush.msra.mxu0 0.0
    %174 = vmatpush.msra.mxu0 %v50
    %175 = vmatpush.msra.mxu0 %v49
    %176 = vmatpush.msra.mxu0 %v48
    %177 = vmatpush.msra.mxu0 %v47
    %178 = vmatmul.f32.gmra.mxu0 %v160
    %v179 = vpop.f32.mrf.mxu0
    %v180 = vadd.f32 0.0, %v179
    %181 = vdwg.mxu0
    %v183 = vrot.slane %v180, 6
    %v185 = vadd.f32 %v82, %v183
    %v186 = vxor.u32 %v185, 2147483648
    %v187 = vmul.f32 %v186, 1.442695
    %v188 = vpow.pop %v187
    %v189 = vadd.f32 %v188, 1.0
    %v190 = vrcp.pop %v189
    %v191 = vmul.f32 %v189, %v190
    %v192 = vsub.f32 1.0, %v191
    %v193 = vmul.f32 %v190, %v192
    %v194 = vadd.f32 %v190, %v193
    %vm195 = vweird.f32 %v189
    %vm196 = vweird.f32 %v190
    %vm197 = vmor %vm195, %vm196
    %v198 = vsel %vm197, %v190, %v194
    %v199 = vand.u32 2147483647, %v189
    %vm200 = vcmp.eq.f32.partialorder %v199, 8.507059e+37
    %v201 = vand.u32 %v189, 2147483648
    %v202 = vor.u32 1.1754944e-38, %v201
    %v203 = vsel %vm200, %v202, %v198
    %v204 = vmul.f32 1.0, %v203
    %v205 = vtanh.pop %v185
    %v207 = vrot.slane %v147, 6
    %v209 = vmul.f32 %v204, %v207
    %211 = vrot.lane.b32.xlu0 %v205, 64
    %v212 = vpop.permute.xlu0 %211
    %v214 = vmul.f32 %v204, %v212
    %216 = vrot.lane.b32.xlu0 %v214, 32
    %v217 = vpop.permute.xlu0 %216
    %v219 = vadd.f32 %v209, %v217
    %v220 = vtanh.pop %v219
    %222 = vrot.lane.b32.xlu0 %v220, 64
    %v223 = vpop.permute.xlu0 %222
    %v225 = vmul.f32 %v204, %v223
    %227 = vrot.lane.b32.xlu0 %v225, 32
    %v228 = vpop.permute.xlu0 %227
    %vm230 = vcmask 257026
    %231 = vst.msk [vmem:[#allocation2] sm:$0xc] %vm230, %v228
    %v232 = vrot.slane %v225, 2
    %233 = vrot.lane.b32.xlu0 %v232, 32
    %v234 = vpop.permute.xlu0 %233
    %v235 = vsel %vm57, %v234, 0
    %237 = vmatpush.msra.mxu0 0.0
    %238 = vmatpush.msra.mxu0 0.0
    %239 = vmatpush.msra.mxu0 0.0
    %240 = vmatpush.msra.mxu0 0.0
    %241 = vmatpush.msra.mxu0 0.0
    %242 = vmatpush.msra.mxu0 0.0
    %243 = vmatpush.msra.mxu0 0.0
    %244 = vmatpush.msra.mxu0 0.0
    %245 = vmatpush.msra.mxu0 0.0
    %246 = vmatpush.msra.mxu0 0.0
    %247 = vmatpush.msra.mxu0 0.0
    %248 = vmatpush.msra.mxu0 0.0
    %249 = vmatpush.msra.mxu0 %v50
    %250 = vmatpush.msra.mxu0 %v49
    %251 = vmatpush.msra.mxu0 %v48
    %252 = vmatpush.msra.mxu0 %v47
    %253 = vmatmul.f32.gmra.mxu0 %v235
    %v254 = vpop.f32.mrf.mxu0
    %v255 = vadd.f32 0.0, %v254
    %256 = vdwg.mxu0
    %v258 = vrot.slane %v255, 4
    %v260 = vadd.f32 %v82, %v258
    %v261 = vxor.u32 %v260, 2147483648
    %v262 = vmul.f32 %v261, 1.442695
    %v263 = vpow.pop %v262
    %v264 = vadd.f32 %v263, 1.0
    %v265 = vrcp.pop %v264
    %v266 = vmul.f32 %v264, %v265
    %v267 = vsub.f32 1.0, %v266
    %v268 = vmul.f32 %v265, %v267
    %v269 = vadd.f32 %v265, %v268
    %vm270 = vweird.f32 %v264
    %vm271 = vweird.f32 %v265
    %vm272 = vmor %vm270, %vm271
    %v273 = vsel %vm272, %v265, %v269
    %v274 = vand.u32 2147483647, %v264
    %vm275 = vcmp.eq.f32.partialorder %v274, 8.507059e+37
    %v276 = vand.u32 %v264, 2147483648
    %v277 = vor.u32 1.1754944e-38, %v276
    %v278 = vsel %vm275, %v277, %v273
    %v279 = vmul.f32 1.0, %v278
    %v280 = vtanh.pop %v260
    %v282 = vrot.slane %v219, 6
    %v284 = vmul.f32 %v279, %v282
    %286 = vrot.lane.b32.xlu0 %v280, 64
    %v287 = vpop.permute.xlu0 %286
    %v289 = vmul.f32 %v279, %v287
    %291 = vrot.lane.b32.xlu0 %v289, 32
    %v292 = vpop.permute.xlu0 %291
    %v294 = vadd.f32 %v284, %v292
    %v295 = vtanh.pop %v294
    %297 = vrot.lane.b32.xlu0 %v295, 64
    %v298 = vpop.permute.xlu0 %297
    %v300 = vmul.f32 %v279, %v298
    %302 = vrot.lane.b32.xlu0 %v300, 32
    %v303 = vpop.permute.xlu0 %302
    %vm305 = vcmask 259076
    %306 = vst.msk [vmem:[#allocation2] sm:$0x30] %vm305, %v303
    %v307 = vrot.slane %v300, 4
    %308 = vrot.lane.b32.xlu0 %v307, 32
    %v309 = vpop.permute.xlu0 %308
    %v310 = vsel %vm57, %v309, 0
    %312 = vmatpush.msra.mxu0 0.0
    %313 = vmatpush.msra.mxu0 0.0
    %314 = vmatpush.msra.mxu0 0.0
    %315 = vmatpush.msra.mxu0 0.0
    %316 = vmatpush.msra.mxu0 0.0
    %317 = vmatpush.msra.mxu0 0.0
    %318 = vmatpush.msra.mxu0 0.0
    %319 = vmatpush.msra.mxu0 0.0
    %320 = vmatpush.msra.mxu0 0.0
    %321 = vmatpush.msra.mxu0 0.0
    %322 = vmatpush.msra.mxu0 0.0
    %323 = vmatpush.msra.mxu0 0.0
    %324 = vmatpush.msra.mxu0 %v50
    %325 = vmatpush.msra.mxu0 %v49
    %326 = vmatpush.msra.mxu0 %v48
    %327 = vmatpush.msra.mxu0 %v47
    %328 = vmatmul.f32.gmra.mxu0 %v310
    %v329 = vpop.f32.mrf.mxu0
    %v330 = vadd.f32 0.0, %v329
    %331 = vdwg.mxu0
    %v333 = vrot.slane %v330, 2
    %v335 = vadd.f32 %v82, %v333
    %v336 = vxor.u32 %v335, 2147483648
    %v337 = vmul.f32 %v336, 1.442695
    %v338 = vpow.pop %v337
    %v339 = vadd.f32 %v338, 1.0
    %v340 = vrcp.pop %v339
    %v341 = vmul.f32 %v339, %v340
    %v342 = vsub.f32 1.0, %v341
    %v343 = vmul.f32 %v340, %v342
    %v344 = vadd.f32 %v340, %v343
    %vm345 = vweird.f32 %v339
    %vm346 = vweird.f32 %v340
    %vm347 = vmor %vm345, %vm346
    %v348 = vsel %vm347, %v340, %v344
    %v349 = vand.u32 2147483647, %v339
    %vm350 = vcmp.eq.f32.partialorder %v349, 8.507059e+37
    %v351 = vand.u32 %v339, 2147483648
    %v352 = vor.u32 1.1754944e-38, %v351
    %v353 = vsel %vm350, %v352, %v348
    %v354 = vmul.f32 1.0, %v353
    %v355 = vtanh.pop %v335
    %v357 = vrot.slane %v294, 6
    %v359 = vmul.f32 %v354, %v357
    %361 = vrot.lane.b32.xlu0 %v355, 64
    %v362 = vpop.permute.xlu0 %361
    %v364 = vmul.f32 %v354, %v362
    %366 = vrot.lane.b32.xlu0 %v364, 32
    %v367 = vpop.permute.xlu0 %366
    %v369 = vadd.f32 %v359, %v367
    %v370 = vtanh.pop %v369
    %372 = vrot.lane.b32.xlu0 %v370, 64
    %v373 = vpop.permute.xlu0 %372
    %v375 = vmul.f32 %v354, %v373
    %377 = vrot.lane.b32.xlu0 %v375, 32
    %v378 = vpop.permute.xlu0 %377
    %vm380 = vcmask 261126
    %381 = vst.msk [vmem:[#allocation2] sm:$0xc0] %vm380, %v378
    %v382 = vrot.slane %v375, 6
    %383 = vrot.lane.b32.xlu0 %v382, 32
    %v384 = vpop.permute.xlu0 %383
    %v385 = vsel %vm57, %v384, 0
    %387 = vmatpush.msra.mxu0 0.0
    %388 = vmatpush.msra.mxu0 0.0
    %389 = vmatpush.msra.mxu0 0.0
    %390 = vmatpush.msra.mxu0 0.0
    %391 = vmatpush.msra.mxu0 0.0
    %392 = vmatpush.msra.mxu0 0.0
    %393 = vmatpush.msra.mxu0 0.0
    %394 = vmatpush.msra.mxu0 0.0
    %395 = vmatpush.msra.mxu0 0.0
    %396 = vmatpush.msra.mxu0 0.0
    %397 = vmatpush.msra.mxu0 0.0
    %398 = vmatpush.msra.mxu0 0.0
    %399 = vmatpush.msra.mxu0 %v50
    %400 = vmatpush.msra.mxu0 %v49
    %401 = vmatpush.msra.mxu0 %v48
    %402 = vmatpush.msra.mxu0 %v47
    %403 = vmatmul.f32.gmra.mxu0 %v385
    %v404 = vpop.f32.mrf.mxu0
    %v405 = vadd.f32 0.0, %v404
    %406 = vdwg.mxu0
    %v407 = vadd.f32 %v85, %v405
    %v408 = vxor.u32 %v407, 2147483648
    %v409 = vmul.f32 %v408, 1.442695
    %v410 = vpow.pop %v409
    %v411 = vadd.f32 %v410, 1.0
    %v412 = vrcp.pop %v411
    %v413 = vmul.f32 %v411, %v412
    %v414 = vsub.f32 1.0, %v413
    %v415 = vmul.f32 %v412, %v414
    %v416 = vadd.f32 %v412, %v415
    %vm417 = vweird.f32 %v411
    %vm418 = vweird.f32 %v412
    %vm419 = vmor %vm417, %vm418
    %v420 = vsel %vm419, %v412, %v416
    %v421 = vand.u32 2147483647, %v411
    %vm422 = vcmp.eq.f32.partialorder %v421, 8.507059e+37
    %v423 = vand.u32 %v411, 2147483648
    %v424 = vor.u32 1.1754944e-38, %v423
    %v425 = vsel %vm422, %v424, %v420
    %v426 = vmul.f32 1.0, %v425
    %v427 = vtanh.pop %v407
    %v429 = vrot.slane %v369, 6
    %v431 = vmul.f32 %v426, %v429
    %433 = vrot.lane.b32.xlu0 %v427, 64
    %v434 = vpop.permute.xlu0 %433
    %v436 = vmul.f32 %v426, %v434
    %438 = vrot.lane.b32.xlu0 %v436, 32
    %v439 = vpop.permute.xlu0 %438
    %v441 = vadd.f32 %v431, %v439
    %v442 = vtanh.pop %v441
    %444 = vrot.lane.b32.xlu0 %v442, 64
    %v445 = vpop.permute.xlu0 %444
    %v447 = vmul.f32 %v426, %v445
    %449 = vrot.lane.b32.xlu0 %v447, 32
    %v450 = vpop.permute.xlu0 %449
    %452 = vst.msk [vmem:[#allocation2 + $0x8] sm:$0x3] %vm158, %v450
    %v453 = vsel %vm57, %v450, 0
    %455 = vmatpush.msra.mxu0 0.0
    %456 = vmatpush.msra.mxu0 0.0
    %457 = vmatpush.msra.mxu0 0.0
    %458 = vmatpush.msra.mxu0 0.0
    %459 = vmatpush.msra.mxu0 0.0
    %460 = vmatpush.msra.mxu0 0.0
    %461 = vmatpush.msra.mxu0 0.0
    %462 = vmatpush.msra.mxu0 0.0
    %463 = vmatpush.msra.mxu0 0.0
    %464 = vmatpush.msra.mxu0 0.0
    %465 = vmatpush.msra.mxu0 0.0
    %466 = vmatpush.msra.mxu0 0.0
    %467 = vmatpush.msra.mxu0 %v50
    %468 = vmatpush.msra.mxu0 %v49
    %469 = vmatpush.msra.mxu0 %v48
    %470 = vmatpush.msra.mxu0 %v47
    %471 = vmatmul.f32.gmra.mxu0 %v453
    %v472 = vpop.f32.mrf.mxu0
    %v473 = vadd.f32 0.0, %v472
    %474 = vdwg.mxu0
    %v476 = vrot.slane %v473, 6
    %v478 = vadd.f32 %v85, %v476
    %v479 = vxor.u32 %v478, 2147483648
    %v480 = vmul.f32 %v479, 1.442695
    %v481 = vpow.pop %v480
    %v482 = vadd.f32 %v481, 1.0
    %v483 = vrcp.pop %v482
    %v484 = vmul.f32 %v482, %v483
    %v485 = vsub.f32 1.0, %v484
    %v486 = vmul.f32 %v483, %v485
    %v487 = vadd.f32 %v483, %v486
    %vm488 = vweird.f32 %v482
    %vm489 = vweird.f32 %v483
    %vm490 = vmor %vm488, %vm489
    %v491 = vsel %vm490, %v483, %v487
    %v492 = vand.u32 2147483647, %v482
    %vm493 = vcmp.eq.f32.partialorder %v492, 8.507059e+37
    %v494 = vand.u32 %v482, 2147483648
    %v495 = vor.u32 1.1754944e-38, %v494
    %v496 = vsel %vm493, %v495, %v491
    %v497 = vmul.f32 1.0, %v496
    %v498 = vtanh.pop %v478
    %v500 = vrot.slane %v441, 6
    %v502 = vmul.f32 %v497, %v500
    %504 = vrot.lane.b32.xlu0 %v498, 64
    %v505 = vpop.permute.xlu0 %504
    %v507 = vmul.f32 %v497, %v505
    %509 = vrot.lane.b32.xlu0 %v507, 32
    %v510 = vpop.permute.xlu0 %509
    %v512 = vadd.f32 %v502, %v510
    %v513 = vtanh.pop %v512
    %515 = vrot.lane.b32.xlu0 %v513, 64
    %v516 = vpop.permute.xlu0 %515
    %v518 = vmul.f32 %v497, %v516
    %520 = vrot.lane.b32.xlu0 %v518, 32
    %v521 = vpop.permute.xlu0 %520
    %523 = vst.msk [vmem:[#allocation2 + $0x8] sm:$0xc] %vm230, %v521
    %v524 = vrot.slane %v518, 2
    %525 = vrot.lane.b32.xlu0 %v524, 32
    %v526 = vpop.permute.xlu0 %525
    %v527 = vsel %vm57, %v526, 0
    %529 = vmatpush.msra.mxu0 0.0
    %530 = vmatpush.msra.mxu0 0.0
    %531 = vmatpush.msra.mxu0 0.0
    %532 = vmatpush.msra.mxu0 0.0
    %533 = vmatpush.msra.mxu0 0.0
    %534 = vmatpush.msra.mxu0 0.0
    %535 = vmatpush.msra.mxu0 0.0
    %536 = vmatpush.msra.mxu0 0.0
    %537 = vmatpush.msra.mxu0 0.0
    %538 = vmatpush.msra.mxu0 0.0
    %539 = vmatpush.msra.mxu0 0.0
    %540 = vmatpush.msra.mxu0 0.0
    %541 = vmatpush.msra.mxu0 %v50
    %542 = vmatpush.msra.mxu0 %v49
    %543 = vmatpush.msra.mxu0 %v48
    %544 = vmatpush.msra.mxu0 %v47
    %545 = vmatmul.f32.gmra.mxu0 %v527
    %v546 = vpop.f32.mrf.mxu0
    %v547 = vadd.f32 0.0, %v546
    %548 = vdwg.mxu0
    %v550 = vrot.slane %v547, 4
    %v552 = vadd.f32 %v85, %v550
    %v553 = vxor.u32 %v552, 2147483648
    %v554 = vmul.f32 %v553, 1.442695
    %v555 = vpow.pop %v554
    %v556 = vadd.f32 %v555, 1.0
    %v557 = vrcp.pop %v556
    %v558 = vmul.f32 %v556, %v557
    %v559 = vsub.f32 1.0, %v558
    %v560 = vmul.f32 %v557, %v559
    %v561 = vadd.f32 %v557, %v560
    %vm562 = vweird.f32 %v556
    %vm563 = vweird.f32 %v557
    %vm564 = vmor %vm562, %vm563
    %v565 = vsel %vm564, %v557, %v561
    %v566 = vand.u32 2147483647, %v556
    %vm567 = vcmp.eq.f32.partialorder %v566, 8.507059e+37
    %v568 = vand.u32 %v556, 2147483648
    %v569 = vor.u32 1.1754944e-38, %v568
    %v570 = vsel %vm567, %v569, %v565
    %v571 = vmul.f32 1.0, %v570
    %v572 = vtanh.pop %v552
    %v574 = vrot.slane %v512, 6
    %v576 = vmul.f32 %v571, %v574
    %578 = vrot.lane.b32.xlu0 %v572, 64
    %v579 = vpop.permute.xlu0 %578
    %v581 = vmul.f32 %v571, %v579
    %583 = vrot.lane.b32.xlu0 %v581, 32
    %v584 = vpop.permute.xlu0 %583
    %v586 = vadd.f32 %v576, %v584
    %v587 = vtanh.pop %v586
    %589 = vrot.lane.b32.xlu0 %v587, 64
    %v590 = vpop.permute.xlu0 %589
    %v592 = vmul.f32 %v571, %v590
    %594 = vrot.lane.b32.xlu0 %v592, 32
    %v595 = vpop.permute.xlu0 %594
    %597 = vst.msk [vmem:[#allocation2 + $0x8] sm:$0x30] %vm305, %v595
    %v598 = vrot.slane %v592, 4
    %599 = vrot.lane.b32.xlu0 %v598, 32
    %v600 = vpop.permute.xlu0 %599
    %v601 = vsel %vm57, %v600, 0
    %603 = vmatpush.msra.mxu0 0.0
    %604 = vmatpush.msra.mxu0 0.0
    %605 = vmatpush.msra.mxu0 0.0
    %606 = vmatpush.msra.mxu0 0.0
    %607 = vmatpush.msra.mxu0 0.0
    %608 = vmatpush.msra.mxu0 0.0
    %609 = vmatpush.msra.mxu0 0.0
    %610 = vmatpush.msra.mxu0 0.0
    %611 = vmatpush.msra.mxu0 0.0
    %612 = vmatpush.msra.mxu0 0.0
    %613 = vmatpush.msra.mxu0 0.0
    %614 = vmatpush.msra.mxu0 0.0
    %615 = vmatpush.msra.mxu0 %v50
    %616 = vmatpush.msra.mxu0 %v49
    %617 = vmatpush.msra.mxu0 %v48
    %618 = vmatpush.msra.mxu0 %v47
    %619 = vmatmul.f32.gmra.mxu0 %v601
    %v620 = vpop.f32.mrf.mxu0
    %v621 = vadd.f32 0.0, %v620
    %622 = vdwg.mxu0
    %v624 = vrot.slane %v621, 2
    %v626 = vadd.f32 %v85, %v624
    %v627 = vxor.u32 %v626, 2147483648
    %v628 = vmul.f32 %v627, 1.442695
    %v629 = vpow.pop %v628
    %v630 = vadd.f32 %v629, 1.0
    %v631 = vrcp.pop %v630
    %v632 = vmul.f32 %v630, %v631
    %v633 = vsub.f32 1.0, %v632
    %v634 = vmul.f32 %v631, %v633
    %v635 = vadd.f32 %v631, %v634
    %vm636 = vweird.f32 %v630
    %vm637 = vweird.f32 %v631
    %vm638 = vmor %vm636, %vm637
    %v639 = vsel %vm638, %v631, %v635
    %v640 = vand.u32 2147483647, %v630
    %vm641 = vcmp.eq.f32.partialorder %v640, 8.507059e+37
    %v642 = vand.u32 %v630, 2147483648
    %v643 = vor.u32 1.1754944e-38, %v642
    %v644 = vsel %vm641, %v643, %v639
    %v645 = vmul.f32 1.0, %v644
    %v646 = vtanh.pop %v626
    %v648 = vrot.slane %v586, 6
    %v650 = vmul.f32 %v645, %v648
    %652 = vrot.lane.b32.xlu0 %v646, 64
    %v653 = vpop.permute.xlu0 %652
    %v655 = vmul.f32 %v645, %v653
    %657 = vrot.lane.b32.xlu0 %v655, 32
    %v658 = vpop.permute.xlu0 %657
    %v660 = vadd.f32 %v650, %v658
    %v661 = vtanh.pop %v660
    %663 = vrot.lane.b32.xlu0 %v661, 64
    %v664 = vpop.permute.xlu0 %663
    %v666 = vmul.f32 %v645, %v664
    %668 = vrot.lane.b32.xlu0 %v666, 32
    %v669 = vpop.permute.xlu0 %668
    %671 = vst.msk [vmem:[#allocation2 + $0x8] sm:$0xc0] %vm380, %v669
    %672 = vst.msk [vmem:[#allocation3 - $0x6] sm:$0xc0] %vm380, %v669
    %674 = vrot.lane.b32.xlu0 %v660, 96
    %v675 = vpop.permute.xlu0 %674
    %677 = vst.msk [vmem:[#allocation5 - $0x6] sm:$0xc0] %vm380, %v675
    %v678 = vld [vmem:[%s6] sm:$0xff]
    %v679 = vld [vmem:[%s6 + $0x8] sm:$0xff]
    %v680 = vld [vmem:[%s6 + $0x10] sm:$0xff]
    %v681 = vld [vmem:[%s6 + $0x18] sm:$0xff]
    %v682 = vld [vmem:[%s7] sm:$0xff]
    %v683 = vld [vmem:[%s7 + $0x8] sm:$0xff]
    %v684 = vld [vmem:[%s7 + $0x10] sm:$0xff]
    %v685 = vld [vmem:[%s7 + $0x18] sm:$0xff]
    %v686 = vld [vmem:[%s8] sm:$0x1]
    %v687 = vld [vmem:[#allocation2] sm:$0xff]
    %v688 = vld [vmem:[#allocation2 + $0x8] sm:$0xff]
    %v690 = vperm.slane %v686, 0
    %v693 = vsel %vm57, %v687, 0
    %v696 = vsel %vm57, %v688, 0
    %698 = vmatpush.msra.mxu0 0.0
    %699 = vmatpush.msra.mxu0 0.0
    %700 = vmatpush.msra.mxu0 0.0
    %701 = vmatpush.msra.mxu0 0.0
    %702 = vmatpush.msra.mxu0 0.0
    %703 = vmatpush.msra.mxu0 0.0
    %704 = vmatpush.msra.mxu0 0.0
    %705 = vmatpush.msra.mxu0 0.0
    %706 = vmatpush.msra.mxu0 0.0
    %707 = vmatpush.msra.mxu0 0.0
    %708 = vmatpush.msra.mxu0 0.0
    %709 = vmatpush.msra.mxu0 0.0
    %710 = vmatpush.msra.mxu0 %v681
    %711 = vmatpush.msra.mxu0 %v680
    %712 = vmatpush.msra.mxu0 %v679
    %713 = vmatpush.msra.mxu0 %v678
    %714 = vmatmul.f32.gmra.mxu0 %v693
    %v715 = vpop.f32.mrf.mxu0
    %v716 = vadd.f32 %v690, %v715
    %717 = vmatmul.f32.gmra.mxu0 %v696
    %v718 = vpop.f32.mrf.mxu0
    %v719 = vadd.f32 %v690, %v718
    %720 = vdwg.mxu0
    %s721 = scalar_lea.vmem %s1, 2
    %v722 = vld [vmem:[%s721] sm:$0x3]
    %s723 = scalar_lea.vmem %s2, 2
    %v724 = vld [vmem:[%s723] sm:$0x3]
    %v726 = vsel %vm57, %v722, 0
    %728 = vmatpush.msra.mxu0 0.0
    %729 = vmatpush.msra.mxu0 0.0
    %730 = vmatpush.msra.mxu0 0.0
    %731 = vmatpush.msra.mxu0 0.0
    %732 = vmatpush.msra.mxu0 0.0
    %733 = vmatpush.msra.mxu0 0.0
    %734 = vmatpush.msra.mxu0 0.0
    %735 = vmatpush.msra.mxu0 0.0
    %736 = vmatpush.msra.mxu0 0.0
    %737 = vmatpush.msra.mxu0 0.0
    %738 = vmatpush.msra.mxu0 0.0
    %739 = vmatpush.msra.mxu0 0.0
    %740 = vmatpush.msra.mxu0 %v685
    %741 = vmatpush.msra.mxu0 %v684
    %742 = vmatpush.msra.mxu0 %v683
    %743 = vmatpush.msra.mxu0 %v682
    %744 = vmatmul.f32.gmra.mxu0 %v726
    %v745 = vpop.f32.mrf.mxu0
    %v746 = vadd.f32 0.0, %v745
    %747 = vdwg.mxu0
    %v748 = vadd.f32 %v716, %v746
    %v749 = vxor.u32 %v748, 2147483648
    %v750 = vmul.f32 %v749, 1.442695
    %v751 = vpow.pop %v750
    %v752 = vadd.f32 %v751, 1.0
    %v753 = vrcp.pop %v752
    %v754 = vmul.f32 %v752, %v753
    %v755 = vsub.f32 1.0, %v754
    %v756 = vmul.f32 %v753, %v755
    %v757 = vadd.f32 %v753, %v756
    %vm758 = vweird.f32 %v752
    %vm759 = vweird.f32 %v753
    %vm760 = vmor %vm758, %vm759
    %v761 = vsel %vm760, %v753, %v757
    %v762 = vand.u32 2147483647, %v752
    %vm763 = vcmp.eq.f32.partialorder %v762, 8.507059e+37
    %v764 = vand.u32 %v752, 2147483648
    %v765 = vor.u32 1.1754944e-38, %v764
    %v766 = vsel %vm763, %v765, %v761
    %v767 = vmul.f32 1.0, %v766
    %v768 = vtanh.pop %v748
    %770 = vrot.lane.b32.xlu0 %v724, 32
    %v771 = vpop.permute.xlu0 %770
    %v773 = vmul.f32 %v767, %v771
    %775 = vrot.lane.b32.xlu0 %v768, 64
    %v776 = vpop.permute.xlu0 %775
    %v778 = vmul.f32 %v767, %v776
    %780 = vrot.lane.b32.xlu0 %v778, 32
    %v781 = vpop.permute.xlu0 %780
    %v783 = vadd.f32 %v773, %v781
    %v784 = vtanh.pop %v783
    %786 = vrot.lane.b32.xlu0 %v784, 64
    %v787 = vpop.permute.xlu0 %786
    %v789 = vmul.f32 %v767, %v787
    %791 = vrot.lane.b32.xlu0 %v789, 32
    %v792 = vpop.permute.xlu0 %791
    %v793 = vsel %vm57, %v792, 0
    %795 = vmatpush.msra.mxu0 0.0
    %796 = vmatpush.msra.mxu0 0.0
    %797 = vmatpush.msra.mxu0 0.0
    %798 = vmatpush.msra.mxu0 0.0
    %799 = vmatpush.msra.mxu0 0.0
    %800 = vmatpush.msra.mxu0 0.0
    %801 = vmatpush.msra.mxu0 0.0
    %802 = vmatpush.msra.mxu0 0.0
    %803 = vmatpush.msra.mxu0 0.0
    %804 = vmatpush.msra.mxu0 0.0
    %805 = vmatpush.msra.mxu0 0.0
    %806 = vmatpush.msra.mxu0 0.0
    %807 = vmatpush.msra.mxu0 %v685
    %808 = vmatpush.msra.mxu0 %v684
    %809 = vmatpush.msra.mxu0 %v683
    %810 = vmatpush.msra.mxu0 %v682
    %811 = vmatmul.f32.gmra.mxu0 %v793
    %v812 = vpop.f32.mrf.mxu0
    %v813 = vadd.f32 0.0, %v812
    %814 = vdwg.mxu0
    %v816 = vrot.slane %v813, 6
    %v818 = vadd.f32 %v716, %v816
    %v819 = vxor.u32 %v818, 2147483648
    %v820 = vmul.f32 %v819, 1.442695
    %v821 = vpow.pop %v820
    %v822 = vadd.f32 %v821, 1.0
    %v823 = vrcp.pop %v822
    %v824 = vmul.f32 %v822, %v823
    %v825 = vsub.f32 1.0, %v824
    %v826 = vmul.f32 %v823, %v825
    %v827 = vadd.f32 %v823, %v826
    %vm828 = vweird.f32 %v822
    %vm829 = vweird.f32 %v823
    %vm830 = vmor %vm828, %vm829
    %v831 = vsel %vm830, %v823, %v827
    %v832 = vand.u32 2147483647, %v822
    %vm833 = vcmp.eq.f32.partialorder %v832, 8.507059e+37
    %v834 = vand.u32 %v822, 2147483648
    %v835 = vor.u32 1.1754944e-38, %v834
    %v836 = vsel %vm833, %v835, %v831
    %v837 = vmul.f32 1.0, %v836
    %v838 = vtanh.pop %v818
    %v840 = vrot.slane %v783, 6
    %v842 = vmul.f32 %v837, %v840
    %844 = vrot.lane.b32.xlu0 %v838, 64
    %v845 = vpop.permute.xlu0 %844
    %v847 = vmul.f32 %v837, %v845
    %849 = vrot.lane.b32.xlu0 %v847, 32
    %v850 = vpop.permute.xlu0 %849
    %v852 = vadd.f32 %v842, %v850
    %v853 = vtanh.pop %v852
    %855 = vrot.lane.b32.xlu0 %v853, 64
    %v856 = vpop.permute.xlu0 %855
    %v858 = vmul.f32 %v837, %v856
    %v860 = vrot.slane %v858, 2
    %861 = vrot.lane.b32.xlu0 %v860, 32
    %v862 = vpop.permute.xlu0 %861
    %v863 = vsel %vm57, %v862, 0
    %865 = vmatpush.msra.mxu0 0.0
    %866 = vmatpush.msra.mxu0 0.0
    %867 = vmatpush.msra.mxu0 0.0
    %868 = vmatpush.msra.mxu0 0.0
    %869 = vmatpush.msra.mxu0 0.0
    %870 = vmatpush.msra.mxu0 0.0
    %871 = vmatpush.msra.mxu0 0.0
    %872 = vmatpush.msra.mxu0 0.0
    %873 = vmatpush.msra.mxu0 0.0
    %874 = vmatpush.msra.mxu0 0.0
    %875 = vmatpush.msra.mxu0 0.0
    %876 = vmatpush.msra.mxu0 0.0
    %877 = vmatpush.msra.mxu0 %v685
    %878 = vmatpush.msra.mxu0 %v684
    %879 = vmatpush.msra.mxu0 %v683
    %880 = vmatpush.msra.mxu0 %v682
    %881 = vmatmul.f32.gmra.mxu0 %v863
    %v882 = vpop.f32.mrf.mxu0
    %v883 = vadd.f32 0.0, %v882
    %884 = vdwg.mxu0
    %v886 = vrot.slane %v883, 4
    %v888 = vadd.f32 %v716, %v886
    %v889 = vxor.u32 %v888, 2147483648
    %v890 = vmul.f32 %v889, 1.442695
    %v891 = vpow.pop %v890
    %v892 = vadd.f32 %v891, 1.0
    %v893 = vrcp.pop %v892
    %v894 = vmul.f32 %v892, %v893
    %v895 = vsub.f32 1.0, %v894
    %v896 = vmul.f32 %v893, %v895
    %v897 = vadd.f32 %v893, %v896
    %vm898 = vweird.f32 %v892
    %vm899 = vweird.f32 %v893
    %vm900 = vmor %vm898, %vm899
    %v901 = vsel %vm900, %v893, %v897
    %v902 = vand.u32 2147483647, %v892
    %vm903 = vcmp.eq.f32.partialorder %v902, 8.507059e+37
    %v904 = vand.u32 %v892, 2147483648
    %v905 = vor.u32 1.1754944e-38, %v904
    %v906 = vsel %vm903, %v905, %v901
    %v907 = vmul.f32 1.0, %v906
    %v908 = vtanh.pop %v888
    %v910 = vrot.slane %v852, 6
    %v912 = vmul.f32 %v907, %v910
    %914 = vrot.lane.b32.xlu0 %v908, 64
    %v915 = vpop.permute.xlu0 %914
    %v917 = vmul.f32 %v907, %v915
    %919 = vrot.lane.b32.xlu0 %v917, 32
    %v920 = vpop.permute.xlu0 %919
    %v922 = vadd.f32 %v912, %v920
    %v923 = vtanh.pop %v922
    %925 = vrot.lane.b32.xlu0 %v923, 64
    %v926 = vpop.permute.xlu0 %925
    %v928 = vmul.f32 %v907, %v926
    %v930 = vrot.slane %v928, 4
    %931 = vrot.lane.b32.xlu0 %v930, 32
    %v932 = vpop.permute.xlu0 %931
    %v933 = vsel %vm57, %v932, 0
    %935 = vmatpush.msra.mxu0 0.0
    %936 = vmatpush.msra.mxu0 0.0
    %937 = vmatpush.msra.mxu0 0.0
    %938 = vmatpush.msra.mxu0 0.0
    %939 = vmatpush.msra.mxu0 0.0
    %940 = vmatpush.msra.mxu0 0.0
    %941 = vmatpush.msra.mxu0 0.0
    %942 = vmatpush.msra.mxu0 0.0
    %943 = vmatpush.msra.mxu0 0.0
    %944 = vmatpush.msra.mxu0 0.0
    %945 = vmatpush.msra.mxu0 0.0
    %946 = vmatpush.msra.mxu0 0.0
    %947 = vmatpush.msra.mxu0 %v685
    %948 = vmatpush.msra.mxu0 %v684
    %949 = vmatpush.msra.mxu0 %v683
    %950 = vmatpush.msra.mxu0 %v682
    %951 = vmatmul.f32.gmra.mxu0 %v933
    %v952 = vpop.f32.mrf.mxu0
    %v953 = vadd.f32 0.0, %v952
    %954 = vdwg.mxu0
    %v956 = vrot.slane %v953, 2
    %v958 = vadd.f32 %v716, %v956
    %v959 = vxor.u32 %v958, 2147483648
    %v960 = vmul.f32 %v959, 1.442695
    %v961 = vpow.pop %v960
    %v962 = vadd.f32 %v961, 1.0
    %v963 = vrcp.pop %v962
    %v964 = vmul.f32 %v962, %v963
    %v965 = vsub.f32 1.0, %v964
    %v966 = vmul.f32 %v963, %v965
    %v967 = vadd.f32 %v963, %v966
    %vm968 = vweird.f32 %v962
    %vm969 = vweird.f32 %v963
    %vm970 = vmor %vm968, %vm969
    %v971 = vsel %vm970, %v963, %v967
    %v972 = vand.u32 2147483647, %v962
    %vm973 = vcmp.eq.f32.partialorder %v972, 8.507059e+37
    %v974 = vand.u32 %v962, 2147483648
    %v975 = vor.u32 1.1754944e-38, %v974
    %v976 = vsel %vm973, %v975, %v971
    %v977 = vmul.f32 1.0, %v976
    %v978 = vtanh.pop %v958
    %v980 = vrot.slane %v922, 6
    %v982 = vmul.f32 %v977, %v980
    %984 = vrot.lane.b32.xlu0 %v978, 64
    %v985 = vpop.permute.xlu0 %984
    %v987 = vmul.f32 %v977, %v985
    %989 = vrot.lane.b32.xlu0 %v987, 32
    %v990 = vpop.permute.xlu0 %989
    %v992 = vadd.f32 %v982, %v990
    %v993 = vtanh.pop %v992
    %995 = vrot.lane.b32.xlu0 %v993, 64
    %v996 = vpop.permute.xlu0 %995
    %v998 = vmul.f32 %v977, %v996
    %v1000 = vrot.slane %v998, 6
    %1001 = vrot.lane.b32.xlu0 %v1000, 32
    %v1002 = vpop.permute.xlu0 %1001
    %v1003 = vsel %vm57, %v1002, 0
    %1005 = vmatpush.msra.mxu0 0.0
    %1006 = vmatpush.msra.mxu0 0.0
    %1007 = vmatpush.msra.mxu0 0.0
    %1008 = vmatpush.msra.mxu0 0.0
    %1009 = vmatpush.msra.mxu0 0.0
    %1010 = vmatpush.msra.mxu0 0.0
    %1011 = vmatpush.msra.mxu0 0.0
    %1012 = vmatpush.msra.mxu0 0.0
    %1013 = vmatpush.msra.mxu0 0.0
    %1014 = vmatpush.msra.mxu0 0.0
    %1015 = vmatpush.msra.mxu0 0.0
    %1016 = vmatpush.msra.mxu0 0.0
    %1017 = vmatpush.msra.mxu0 %v685
    %1018 = vmatpush.msra.mxu0 %v684
    %1019 = vmatpush.msra.mxu0 %v683
    %1020 = vmatpush.msra.mxu0 %v682
    %1021 = vmatmul.f32.gmra.mxu0 %v1003
    %v1022 = vpop.f32.mrf.mxu0
    %v1023 = vadd.f32 0.0, %v1022
    %1024 = vdwg.mxu0
    %v1025 = vadd.f32 %v719, %v1023
    %v1026 = vxor.u32 %v1025, 2147483648
    %v1027 = vmul.f32 %v1026, 1.442695
    %v1028 = vpow.pop %v1027
    %v1029 = vadd.f32 %v1028, 1.0
    %v1030 = vrcp.pop %v1029
    %v1031 = vmul.f32 %v1029, %v1030
    %v1032 = vsub.f32 1.0, %v1031
    %v1033 = vmul.f32 %v1030, %v1032
    %v1034 = vadd.f32 %v1030, %v1033
    %vm1035 = vweird.f32 %v1029
    %vm1036 = vweird.f32 %v1030
    %vm1037 = vmor %vm1035, %vm1036
    %v1038 = vsel %vm1037, %v1030, %v1034
    %v1039 = vand.u32 2147483647, %v1029
    %vm1040 = vcmp.eq.f32.partialorder %v1039, 8.507059e+37
    %v1041 = vand.u32 %v1029, 2147483648
    %v1042 = vor.u32 1.1754944e-38, %v1041
    %v1043 = vsel %vm1040, %v1042, %v1038
    %v1044 = vmul.f32 1.0, %v1043
    %v1045 = vtanh.pop %v1025
    %v1047 = vrot.slane %v992, 6
    %v1049 = vmul.f32 %v1044, %v1047
    %1051 = vrot.lane.b32.xlu0 %v1045, 64
    %v1052 = vpop.permute.xlu0 %1051
    %v1054 = vmul.f32 %v1044, %v1052
    %1056 = vrot.lane.b32.xlu0 %v1054, 32
    %v1057 = vpop.permute.xlu0 %1056
    %v1059 = vadd.f32 %v1049, %v1057
    %v1060 = vtanh.pop %v1059
    %1062 = vrot.lane.b32.xlu0 %v1060, 64
    %v1063 = vpop.permute.xlu0 %1062
    %v1065 = vmul.f32 %v1044, %v1063
    %1067 = vrot.lane.b32.xlu0 %v1065, 32
    %v1068 = vpop.permute.xlu0 %1067
    %v1069 = vsel %vm57, %v1068, 0
    %1071 = vmatpush.msra.mxu0 0.0
    %1072 = vmatpush.msra.mxu0 0.0
    %1073 = vmatpush.msra.mxu0 0.0
    %1074 = vmatpush.msra.mxu0 0.0
    %1075 = vmatpush.msra.mxu0 0.0
    %1076 = vmatpush.msra.mxu0 0.0
    %1077 = vmatpush.msra.mxu0 0.0
    %1078 = vmatpush.msra.mxu0 0.0
    %1079 = vmatpush.msra.mxu0 0.0
    %1080 = vmatpush.msra.mxu0 0.0
    %1081 = vmatpush.msra.mxu0 0.0
    %1082 = vmatpush.msra.mxu0 0.0
    %1083 = vmatpush.msra.mxu0 %v685
    %1084 = vmatpush.msra.mxu0 %v684
    %1085 = vmatpush.msra.mxu0 %v683
    %1086 = vmatpush.msra.mxu0 %v682
    %1087 = vmatmul.f32.gmra.mxu0 %v1069
    %v1088 = vpop.f32.mrf.mxu0
    %v1089 = vadd.f32 0.0, %v1088
    %1090 = vdwg.mxu0
    %v1092 = vrot.slane %v1089, 6
    %v1094 = vadd.f32 %v719, %v1092
    %v1095 = vxor.u32 %v1094, 2147483648
    %v1096 = vmul.f32 %v1095, 1.442695
    %v1097 = vpow.pop %v1096
    %v1098 = vadd.f32 %v1097, 1.0
    %v1099 = vrcp.pop %v1098
    %v1100 = vmul.f32 %v1098, %v1099
    %v1101 = vsub.f32 1.0, %v1100
    %v1102 = vmul.f32 %v1099, %v1101
    %v1103 = vadd.f32 %v1099, %v1102
    %vm1104 = vweird.f32 %v1098
    %vm1105 = vweird.f32 %v1099
    %vm1106 = vmor %vm1104, %vm1105
    %v1107 = vsel %vm1106, %v1099, %v1103
    %v1108 = vand.u32 2147483647, %v1098
    %vm1109 = vcmp.eq.f32.partialorder %v1108, 8.507059e+37
    %v1110 = vand.u32 %v1098, 2147483648
    %v1111 = vor.u32 1.1754944e-38, %v1110
    %v1112 = vsel %vm1109, %v1111, %v1107
    %v1113 = vmul.f32 1.0, %v1112
    %v1114 = vtanh.pop %v1094
    %v1116 = vrot.slane %v1059, 6
    %v1118 = vmul.f32 %v1113, %v1116
    %1120 = vrot.lane.b32.xlu0 %v1114, 64
    %v1121 = vpop.permute.xlu0 %1120
    %v1123 = vmul.f32 %v1113, %v1121
    %1125 = vrot.lane.b32.xlu0 %v1123, 32
    %v1126 = vpop.permute.xlu0 %1125
    %v1128 = vadd.f32 %v1118, %v1126
    %v1129 = vtanh.pop %v1128
    %1131 = vrot.lane.b32.xlu0 %v1129, 64
    %v1132 = vpop.permute.xlu0 %1131
    %v1134 = vmul.f32 %v1113, %v1132
    %v1136 = vrot.slane %v1134, 2
    %1137 = vrot.lane.b32.xlu0 %v1136, 32
    %v1138 = vpop.permute.xlu0 %1137
    %v1139 = vsel %vm57, %v1138, 0
    %1141 = vmatpush.msra.mxu0 0.0
    %1142 = vmatpush.msra.mxu0 0.0
    %1143 = vmatpush.msra.mxu0 0.0
    %1144 = vmatpush.msra.mxu0 0.0
    %1145 = vmatpush.msra.mxu0 0.0
    %1146 = vmatpush.msra.mxu0 0.0
    %1147 = vmatpush.msra.mxu0 0.0
    %1148 = vmatpush.msra.mxu0 0.0
    %1149 = vmatpush.msra.mxu0 0.0
    %1150 = vmatpush.msra.mxu0 0.0
    %1151 = vmatpush.msra.mxu0 0.0
    %1152 = vmatpush.msra.mxu0 0.0
    %1153 = vmatpush.msra.mxu0 %v685
    %1154 = vmatpush.msra.mxu0 %v684
    %1155 = vmatpush.msra.mxu0 %v683
    %1156 = vmatpush.msra.mxu0 %v682
    %1157 = vmatmul.f32.gmra.mxu0 %v1139
    %v1158 = vpop.f32.mrf.mxu0
    %v1159 = vadd.f32 0.0, %v1158
    %1160 = vdwg.mxu0
    %v1162 = vrot.slane %v1159, 4
    %v1164 = vadd.f32 %v719, %v1162
    %v1165 = vxor.u32 %v1164, 2147483648
    %v1166 = vmul.f32 %v1165, 1.442695
    %v1167 = vpow.pop %v1166
    %v1168 = vadd.f32 %v1167, 1.0
    %v1169 = vrcp.pop %v1168
    %v1170 = vmul.f32 %v1168, %v1169
    %v1171 = vsub.f32 1.0, %v1170
    %v1172 = vmul.f32 %v1169, %v1171
    %v1173 = vadd.f32 %v1169, %v1172
    %vm1174 = vweird.f32 %v1168
    %vm1175 = vweird.f32 %v1169
    %vm1176 = vmor %vm1174, %vm1175
    %v1177 = vsel %vm1176, %v1169, %v1173
    %v1178 = vand.u32 2147483647, %v1168
    %vm1179 = vcmp.eq.f32.partialorder %v1178, 8.507059e+37
    %v1180 = vand.u32 %v1168, 2147483648
    %v1181 = vor.u32 1.1754944e-38, %v1180
    %v1182 = vsel %vm1179, %v1181, %v1177
    %v1183 = vmul.f32 1.0, %v1182
    %v1184 = vtanh.pop %v1164
    %v1186 = vrot.slane %v1128, 6
    %v1188 = vmul.f32 %v1183, %v1186
    %1190 = vrot.lane.b32.xlu0 %v1184, 64
    %v1191 = vpop.permute.xlu0 %1190
    %v1193 = vmul.f32 %v1183, %v1191
    %1195 = vrot.lane.b32.xlu0 %v1193, 32
    %v1196 = vpop.permute.xlu0 %1195
    %v1198 = vadd.f32 %v1188, %v1196
    %v1199 = vtanh.pop %v1198
    %1201 = vrot.lane.b32.xlu0 %v1199, 64
    %v1202 = vpop.permute.xlu0 %1201
    %v1204 = vmul.f32 %v1183, %v1202
    %v1206 = vrot.slane %v1204, 4
    %1207 = vrot.lane.b32.xlu0 %v1206, 32
    %v1208 = vpop.permute.xlu0 %1207
    %v1209 = vsel %vm57, %v1208, 0
    %1211 = vmatpush.msra.mxu0 0.0
    %1212 = vmatpush.msra.mxu0 0.0
    %1213 = vmatpush.msra.mxu0 0.0
    %1214 = vmatpush.msra.mxu0 0.0
    %1215 = vmatpush.msra.mxu0 0.0
    %1216 = vmatpush.msra.mxu0 0.0
    %1217 = vmatpush.msra.mxu0 0.0
    %1218 = vmatpush.msra.mxu0 0.0
    %1219 = vmatpush.msra.mxu0 0.0
    %1220 = vmatpush.msra.mxu0 0.0
    %1221 = vmatpush.msra.mxu0 0.0
    %1222 = vmatpush.msra.mxu0 0.0
    %1223 = vmatpush.msra.mxu0 %v685
    %1224 = vmatpush.msra.mxu0 %v684
    %1225 = vmatpush.msra.mxu0 %v683
    %1226 = vmatpush.msra.mxu0 %v682
    %1227 = vmatmul.f32.gmra.mxu0 %v1209
    %v1228 = vpop.f32.mrf.mxu0
    %v1229 = vadd.f32 0.0, %v1228
    %1230 = vdwg.mxu0
    %v1232 = vrot.slane %v1229, 2
    %v1234 = vadd.f32 %v719, %v1232
    %v1235 = vxor.u32 %v1234, 2147483648
    %v1236 = vmul.f32 %v1235, 1.442695
    %v1237 = vpow.pop %v1236
    %v1238 = vadd.f32 %v1237, 1.0
    %v1239 = vrcp.pop %v1238
    %v1240 = vmul.f32 %v1238, %v1239
    %v1241 = vsub.f32 1.0, %v1240
    %v1242 = vmul.f32 %v1239, %v1241
    %v1243 = vadd.f32 %v1239, %v1242
    %vm1244 = vweird.f32 %v1238
    %vm1245 = vweird.f32 %v1239
    %vm1246 = vmor %vm1244, %vm1245
    %v1247 = vsel %vm1246, %v1239, %v1243
    %v1248 = vand.u32 2147483647, %v1238
    %vm1249 = vcmp.eq.f32.partialorder %v1248, 8.507059e+37
    %v1250 = vand.u32 %v1238, 2147483648
    %v1251 = vor.u32 1.1754944e-38, %v1250
    %v1252 = vsel %vm1249, %v1251, %v1247
    %v1253 = vmul.f32 1.0, %v1252
    %v1254 = vtanh.pop %v1234
    %v1256 = vrot.slane %v1198, 6
    %v1258 = vmul.f32 %v1253, %v1256
    %1260 = vrot.lane.b32.xlu0 %v1254, 64
    %v1261 = vpop.permute.xlu0 %1260
    %v1263 = vmul.f32 %v1253, %v1261
    %1265 = vrot.lane.b32.xlu0 %v1263, 32
    %v1266 = vpop.permute.xlu0 %1265
    %v1268 = vadd.f32 %v1258, %v1266
    %v1269 = vtanh.pop %v1268
    %1271 = vrot.lane.b32.xlu0 %v1269, 64
    %v1272 = vpop.permute.xlu0 %1271
    %v1274 = vmul.f32 %v1253, %v1272
    %1276 = vrot.lane.b32.xlu0 %v1274, 32
    %v1277 = vpop.permute.xlu0 %1276
    %s1279 = scalar_lea.vmem [#allocation3], 2
    %1280 = vst.msk [vmem:[%s1279 - $0x6] sm:$0xc0] %vm380, %v1277
    %1282 = vrot.lane.b32.xlu0 %v1268, 96
    %v1283 = vpop.permute.xlu0 %1282
    %s1285 = scalar_lea.vmem [#allocation5], 2
    %1286 = vst.msk [vmem:[%s1285 - $0x6] sm:$0xc0] %vm380, %v1283
    %v1287 = vld [vmem:[%s9] sm:$0xff]
    %v1288 = vld [vmem:[%s9 + $0x8] sm:$0xff]
    %v1289 = vld [vmem:[%s9 + $0x10] sm:$0xff]
    %v1290 = vld [vmem:[%s9 + $0x18] sm:$0xff]
    %v1291 = vld [vmem:[%s10] sm:$0x1]
    %v1293 = vperm.slane %v1291, 0
    %v1295 = vrot.slane %v1274, 6
    %1296 = vrot.lane.b32.xlu0 %v1295, 32
    %v1297 = vpop.permute.xlu0 %1296
    %v1298 = vsel %vm57, %v1297, 0
    %1300 = vmatpush.msra.mxu0 0.0
    %1301 = vmatpush.msra.mxu0 0.0
    %1302 = vmatpush.msra.mxu0 0.0
    %1303 = vmatpush.msra.mxu0 0.0
    %1304 = vmatpush.msra.mxu0 0.0
    %1305 = vmatpush.msra.mxu0 0.0
    %1306 = vmatpush.msra.mxu0 0.0
    %1307 = vmatpush.msra.mxu0 0.0
    %1308 = vmatpush.msra.mxu0 0.0
    %1309 = vmatpush.msra.mxu0 0.0
    %1310 = vmatpush.msra.mxu0 0.0
    %1311 = vmatpush.msra.mxu0 0.0
    %1312 = vmatpush.msra.mxu0 %v1290
    %1313 = vmatpush.msra.mxu0 %v1289
    %1314 = vmatpush.msra.mxu0 %v1288
    %1315 = vmatpush.msra.mxu0 %v1287
    %1316 = vmatmul.f32.gmra.mxu0 %v1298
    %v1317 = vpop.f32.mrf.mxu0
    %v1318 = vadd.f32 %v1293, %v1317
    %1319 = vdwg.mxu0
    %v1320 = vxor.u32 %v1318, 2147483648
    %v1321 = vmul.f32 %v1320, 1.442695
    %v1322 = vpow.pop %v1321
    %v1323 = vadd.f32 %v1322, 1.0
    %v1324 = vrcp.pop %v1323
    %v1325 = vmul.f32 %v1323, %v1324
    %v1326 = vsub.f32 1.0, %v1325
    %v1327 = vmul.f32 %v1324, %v1326
    %v1328 = vadd.f32 %v1324, %v1327
    %vm1329 = vweird.f32 %v1323
    %vm1330 = vweird.f32 %v1324
    %vm1331 = vmor %vm1329, %vm1330
    %v1332 = vsel %vm1331, %v1324, %v1328
    %v1333 = vand.u32 2147483647, %v1323
    %vm1334 = vcmp.eq.f32.partialorder %v1333, 8.507059e+37
    %v1335 = vand.u32 %v1323, 2147483648
    %v1336 = vor.u32 1.1754944e-38, %v1335
    %v1337 = vsel %vm1334, %v1336, %v1332
    %v1338 = vmul.f32 1.0, %v1337
    %vm1339 = vcmask 25600
    %1340 = vst.msk [vmem:[%s11] sm:$0x3] %vm1339, %v1338
    // Predicated region
    $region46: #{lstm_model_forward.1} parent=1 // pred_check
      _
    $region47: #{lstm_model_forward.1} parent=1 // pred_check_branch
      %1342 = sbr.rel (0) target = $region49
    $region48: #{lstm_model_forward.1} parent=1 // pred_region
      _
    $region49: #{lstm_model_forward.1} parent=1 // pred_fallthru
      _
    // Predicated region
    $region50: #{lstm_model_forward.1} parent=1 // pred_check
      _
    $region51: #{lstm_model_forward.1} parent=1 // pred_check_branch
      %1344 = sbr.rel (0) target = $region53
    $region52: #{lstm_model_forward.1} parent=1 // pred_region
      %1346 = vsyncadd [#allocation4], 0
      %s1347 = sshll.u32 [#allocation3], 4
      %s1348 = int_to_ptr.vmem [resolvable:$true] %s1347
      %s1349 = sshll.u32 %s12, 4
      %s1350 = int_to_ptr.hbm [resolvable:$true] %s1349
      %1355 = dma.vmem_to_hbm [thread:$0]  %s1348, 64, %s1350, [#allocation4], 32, 32, 2
    $region53: #{lstm_model_forward.1} parent=1 // pred_fallthru
      _
    // Predicated region
    $region54: #{lstm_model_forward.1} parent=1 // pred_check
      _
    $region55: #{lstm_model_forward.1} parent=1 // pred_check_branch
      %1357 = sbr.rel (0) target = $region57
    $region56: #{lstm_model_forward.1} parent=1 // pred_region
      %1359 = vsyncadd [#allocation6], 0
      %s1360 = sshll.u32 [#allocation5], 4
      %s1361 = int_to_ptr.vmem [resolvable:$true] %s1360
      %s1362 = sshll.u32 %s13, 4
      %s1363 = int_to_ptr.hbm [resolvable:$true] %s1362
      %1368 = dma.vmem_to_hbm [thread:$0]  %s1361, 64, %s1363, [#allocation6], 32, 32, 2
    $region57: #{lstm_model_forward.1} parent=1 // pred_fallthru
      _
    // Predicated region
    $region58: #{lstm_model_forward.1} parent=1 // pred_check
      _
    $region59: #{lstm_model_forward.1} parent=1 // pred_check_branch
      %1370 = sbr.rel (0) target = $region61
    $region60: #{lstm_model_forward.1} parent=1 // pred_region
      _
    $region61: #{lstm_model_forward.1} parent=1 // pred_fallthru
      _
    // Predicated region
    $region62: #{lstm_model_forward.1} parent=1 // pred_check
      _
    $region63: #{lstm_model_forward.1} parent=1 // pred_check_branch
      %1372 = sbr.rel (0) target = $region65
    $region64: #{lstm_model_forward.1} parent=1 // pred_region
      %1374 = dma.done [#allocation4], 64
    $region65: #{lstm_model_forward.1} parent=1 // pred_fallthru
      _
    // Predicated region
    $region66: #{lstm_model_forward.1} parent=1 // pred_check
      _
    $region67: #{lstm_model_forward.1} parent=1 // pred_check_branch
      %1376 = sbr.rel (0) target = $region69
    $region68: #{lstm_model_forward.1} parent=1 // pred_region
      %1378 = dma.done [#allocation6], 64
    $region69: #{lstm_model_forward.1} parent=1 // pred_fallthru
      _
    %1379 = vsyncpa [#allocation4], 1
    %1380 = vsyncpa [#allocation6], 1

</llo_original>
